<compile_context>
chip_gen: v5e
topology: v5e:2x2
jax: 0.10.0
libtpu: 0.0.40
codegen_flags: <defaults>
</compile_context>

<pallas_src>
import jax
import jax.numpy as jnp
from jax import lax
from jax.experimental import pallas as pl
from jax.experimental.pallas import tpu as pltpu


def _self_attention_kernel(xp_ref, w_ref, o_ref):
    """One batch element per grid step.

    xp_ref: (1, Cin, H+2, W+2)  zero-padded NCHW input tile (VMEM)
    w_ref : (2*Cout, 9*Cin)     [conv ; attention] weights, tap-major (dy, dx, cin)
    o_ref : (1, Cout, H*W)      output tile, spatial flattened on the lane axis
    """
    Cin = xp_ref.shape[1]
    Hp = xp_ref.shape[2]
    Wp = xp_ref.shape[3]
    H = Hp - 2
    W = Wp - 2
    Cout = o_ref.shape[1]
    HW = H * W

    # im2col: (9*Cin, H*W) patch matrix built from 9 static shifted slices of the
    # padded image. Row order is tap-major (dy, dx, cin) to match w_ref columns.
    patches = []
    for dy in range(3):
        for dx in range(3):
            patches.append(
                xp_ref[0, :, dy:dy + H, dx:dx + W].reshape(Cin, HW))
    pm = jnp.concatenate(patches, axis=0)  # (9*Cin, H*W), lane-dense

    # One MXU matmul computes BOTH convolutions:
    #   (2*Cout, 9*Cin) @ (9*Cin, H*W) -> (2*Cout, H*W), f32 accumulation.
    both = jnp.dot(w_ref[...], pm, preferred_element_type=jnp.float32)

    feat = both[:Cout, :]
    att = both[Cout:, :]
    out = feat * jax.nn.sigmoid(att)                    # (Cout, H*W), lane-dense
    o_ref[...] = out.reshape(1, Cout, HW).astype(o_ref.dtype)


def self_attention_pallas(x_nchw, w_conv_oihw, w_att_oihw):
    """x_nchw: (N, Cin, H, W); weights: (Cout, Cin, 3, 3) as in torch.nn.Conv2d."""
    N, Cin, H, W = x_nchw.shape
    Cout = w_conv_oihw.shape[0]
    HW = H * W

    # Only wrapper-side data movement: zero pad (padding=1). No NCHW<->NHWC passes.
    x_pad = jnp.pad(x_nchw, ((0, 0), (0, 0), (1, 1), (1, 1)))

    # OIHW -> (Cout, 9*Cin), tap-major (dy, dx, cin); tiny tensors, negligible cost.
    def _flatten_w(w):
        return jnp.transpose(w, (0, 2, 3, 1)).reshape(Cout, 9 * Cin)

    w_both = jnp.concatenate(
        [_flatten_w(w_conv_oihw), _flatten_w(w_att_oihw)], axis=0
    ).astype(x_nchw.dtype)                              # (2*Cout, 9*Cin)

    out_flat = pl.pallas_call(
        _self_attention_kernel,
        out_shape=jax.ShapeDtypeStruct((N, Cout, HW), x_nchw.dtype),
        grid_spec=pltpu.PrefetchScalarGridSpec(
            num_scalar_prefetch=0,
            grid=(N,),
            in_specs=[
                pl.BlockSpec((1, Cin, H + 2, W + 2), lambda n: (n, 0, 0, 0)),
                pl.BlockSpec((2 * Cout, 9 * Cin), lambda n: (0, 0)),
            ],
            out_specs=pl.BlockSpec((1, Cout, HW), lambda n: (n, 0, 0)),
        ),
        compiler_params=pltpu.CompilerParams(
            dimension_semantics=("parallel",)),  # batch -> 2 TCs on v7x
    )(x_pad, w_both)

    # Contiguous reshape (metadata only) back to NCHW.
    return out_flat.reshape(N, Cout, H, W)


def _reference(x_nchw, w_conv_oihw, w_att_oihw):
    """Pure-JAX reference matching torch semantics (NCHW, OIHW, pad=1, no bias)."""
    dn = lax.conv_dimension_numbers(x_nchw.shape, w_conv_oihw.shape,
                                    ("NCHW", "OIHW", "NCHW"))
    feat = lax.conv_general_dilated(x_nchw, w_conv_oihw, (1, 1),
                                    ((1, 1), (1, 1)), dimension_numbers=dn)
    att = lax.conv_general_dilated(x_nchw, w_att_oihw, (1, 1),
                                   ((1, 1), (1, 1)), dimension_numbers=dn)
    return feat * jax.nn.sigmoid(att)


if __name__ == "__main__":
    key = jax.random.PRNGKey(0)
    k_x, k_wc, k_wa = jax.random.split(key, 3)

    N, Cin, Cout, H, W = 2, 4, 4, 16, 16

    x = jax.random.normal(k_x, (N, Cin, H, W), dtype=jnp.float32)
    # torch Conv2d weight layout: OIHW.
    w_conv = 0.1 * jax.random.normal(k_wc, (Cout, Cin, 3, 3), dtype=jnp.float32)
    # The module zero-initializes the attention conv, but after training it is
    # arbitrary — check both cases.
    w_att_zero = jnp.zeros((Cout, Cin, 3, 3), dtype=jnp.float32)
    w_att_rand = 0.1 * jax.random.normal(k_wa, (Cout, Cin, 3, 3), dtype=jnp.float32)

    for w_att in (w_att_zero, w_att_rand):
        out = self_attention_pallas(x, w_conv, w_att)
        out = jax.block_until_ready(out)
        ref = _reference(x, w_conv, w_att)
        assert out.shape == (N, Cout, H, W)
        assert jnp.allclose(out, ref, atol=1e-4, rtol=1e-4)

    print("KERNEL_OK")
</pallas_src>

<mosaic_0001>
module attributes {stable_mosaic.version = 11 : i64} {
  func.func @_self_attention_kernel(%arg0: i32, %arg1: memref<1x4x18x18xf32, #tpu.memory_space<vmem>>, %arg2: memref<8x36xf32, #tpu.memory_space<vmem>>, %arg3: memref<1x4x256xf32, #tpu.memory_space<vmem>>) attributes {dimension_semantics = [#tpu.dimension_semantics<parallel>], iteration_bounds = array<i64: 2>, scalar_prefetch = 0 : i64, scratch_operands = 0 : i64, tpu.core_type = #tpu.core_type<tc>, window_params = [{transform_indices = @transform_0, window_bounds = array<i64: 1, 4, 18, 18>}, {pipeline_mode = #tpu.pipeline_mode<synchronous>, transform_indices = @transform_1, window_bounds = array<i64: 8, 36>}, {transform_indices = @transform_2, window_bounds = array<i64: 1, 4, 256>}]} {
    %c0 = arith.constant 0 : index
    %c0_0 = arith.constant 0 : index
    %c0_1 = arith.constant 0 : index
    %c0_2 = arith.constant 0 : index
    %0 = vector.load %arg1[%c0, %c0_0, %c0_1, %c0_2] : memref<1x4x18x18xf32, #tpu.memory_space<vmem>>, vector<1x4x16x16xf32>
    %1 = vector.shape_cast %0 : vector<1x4x16x16xf32> to vector<4x16x16xf32>
    %2 = vector.shape_cast %1 : vector<4x16x16xf32> to vector<4x256xf32>
    %c0_3 = arith.constant 0 : index
    %c0_4 = arith.constant 0 : index
    %c0_5 = arith.constant 0 : index
    %c1 = arith.constant 1 : index
    %3 = vector.load %arg1[%c0_3, %c0_4, %c0_5, %c1] : memref<1x4x18x18xf32, #tpu.memory_space<vmem>>, vector<1x4x16x16xf32>
    %4 = vector.shape_cast %3 : vector<1x4x16x16xf32> to vector<4x16x16xf32>
    %5 = vector.shape_cast %4 : vector<4x16x16xf32> to vector<4x256xf32>
    %c0_6 = arith.constant 0 : index
    %c0_7 = arith.constant 0 : index
    %c0_8 = arith.constant 0 : index
    %c2 = arith.constant 2 : index
    %6 = vector.load %arg1[%c0_6, %c0_7, %c0_8, %c2] : memref<1x4x18x18xf32, #tpu.memory_space<vmem>>, vector<1x4x16x16xf32>
    %7 = vector.shape_cast %6 : vector<1x4x16x16xf32> to vector<4x16x16xf32>
    %8 = vector.shape_cast %7 : vector<4x16x16xf32> to vector<4x256xf32>
    %c0_9 = arith.constant 0 : index
    %c0_10 = arith.constant 0 : index
    %c1_11 = arith.constant 1 : index
    %c0_12 = arith.constant 0 : index
    %9 = vector.load %arg1[%c0_9, %c0_10, %c1_11, %c0_12] : memref<1x4x18x18xf32, #tpu.memory_space<vmem>>, vector<1x4x16x16xf32>
    %10 = vector.shape_cast %9 : vector<1x4x16x16xf32> to vector<4x16x16xf32>
    %11 = vector.shape_cast %10 : vector<4x16x16xf32> to vector<4x256xf32>
    %c0_13 = arith.constant 0 : index
    %c0_14 = arith.constant 0 : index
    %c1_15 = arith.constant 1 : index
    %c1_16 = arith.constant 1 : index
    %12 = vector.load %arg1[%c0_13, %c0_14, %c1_15, %c1_16] : memref<1x4x18x18xf32, #tpu.memory_space<vmem>>, vector<1x4x16x16xf32>
    %13 = vector.shape_cast %12 : vector<1x4x16x16xf32> to vector<4x16x16xf32>
    %14 = vector.shape_cast %13 : vector<4x16x16xf32> to vector<4x256xf32>
    %c0_17 = arith.constant 0 : index
    %c0_18 = arith.constant 0 : index
    %c1_19 = arith.constant 1 : index
    %c2_20 = arith.constant 2 : index
    %15 = vector.load %arg1[%c0_17, %c0_18, %c1_19, %c2_20] : memref<1x4x18x18xf32, #tpu.memory_space<vmem>>, vector<1x4x16x16xf32>
    %16 = vector.shape_cast %15 : vector<1x4x16x16xf32> to vector<4x16x16xf32>
    %17 = vector.shape_cast %16 : vector<4x16x16xf32> to vector<4x256xf32>
    %c0_21 = arith.constant 0 : index
    %c0_22 = arith.constant 0 : index
    %c2_23 = arith.constant 2 : index
    %c0_24 = arith.constant 0 : index
    %18 = vector.load %arg1[%c0_21, %c0_22, %c2_23, %c0_24] : memref<1x4x18x18xf32, #tpu.memory_space<vmem>>, vector<1x4x16x16xf32>
    %19 = vector.shape_cast %18 : vector<1x4x16x16xf32> to vector<4x16x16xf32>
    %20 = vector.shape_cast %19 : vector<4x16x16xf32> to vector<4x256xf32>
    %c0_25 = arith.constant 0 : index
    %c0_26 = arith.constant 0 : index
    %c2_27 = arith.constant 2 : index
    %c1_28 = arith.constant 1 : index
    %21 = vector.load %arg1[%c0_25, %c0_26, %c2_27, %c1_28] : memref<1x4x18x18xf32, #tpu.memory_space<vmem>>, vector<1x4x16x16xf32>
    %22 = vector.shape_cast %21 : vector<1x4x16x16xf32> to vector<4x16x16xf32>
    %23 = vector.shape_cast %22 : vector<4x16x16xf32> to vector<4x256xf32>
    %c0_29 = arith.constant 0 : index
    %c0_30 = arith.constant 0 : index
    %c2_31 = arith.constant 2 : index
    %c2_32 = arith.constant 2 : index
    %24 = vector.load %arg1[%c0_29, %c0_30, %c2_31, %c2_32] : memref<1x4x18x18xf32, #tpu.memory_space<vmem>>, vector<1x4x16x16xf32>
    %25 = vector.shape_cast %24 : vector<1x4x16x16xf32> to vector<4x16x16xf32>
    %26 = vector.shape_cast %25 : vector<4x16x16xf32> to vector<4x256xf32>
    %27 = tpu.concatenate %2, %5, %8, %11, %14, %17, %20, %23, %26 in 0 : vector<4x256xf32>, vector<4x256xf32>, vector<4x256xf32>, vector<4x256xf32>, vector<4x256xf32>, vector<4x256xf32>, vector<4x256xf32>, vector<4x256xf32>, vector<4x256xf32> -> vector<36x256xf32>
    %c0_33 = arith.constant 0 : index
    %c0_34 = arith.constant 0 : index
    %28 = vector.load %arg2[%c0_33, %c0_34] : memref<8x36xf32, #tpu.memory_space<vmem>>, vector<8x36xf32>
    %cst = arith.constant dense<0.000000e+00> : vector<8x256xf32>
    %29 = tpu.matmul %28, %27, %cst {dimension_numbers = #tpu.dot_dimension_numbers<[1], [0], [0], [1], [0, 0, 1, 1], [], []>} : vector<8x36xf32>, vector<36x256xf32>, vector<8x256xf32> -> vector<8x256xf32>
    %30 = vector.extract_strided_slice %29 {offsets = [0, 0], sizes = [4, 256], strides = [1, 1]} : vector<8x256xf32> to vector<4x256xf32>
    %31 = vector.extract_strided_slice %29 {offsets = [4, 0], sizes = [4, 256], strides = [1, 1]} : vector<8x256xf32> to vector<4x256xf32>
    %32 = arith.negf %31 : vector<4x256xf32>
    %33 = math.exp %32 : vector<4x256xf32>
    %cst_35 = arith.constant 1.000000e+00 : f32
    %34 = vector.broadcast %cst_35 : f32 to vector<4x256xf32>
    %35 = arith.addf %34, %33 : vector<4x256xf32>
    %36 = arith.divf %34, %35 : vector<4x256xf32>
    %37 = arith.mulf %30, %36 : vector<4x256xf32>
    %38 = vector.shape_cast %37 : vector<4x256xf32> to vector<1x4x256xf32>
    %c0_36 = arith.constant 0 : index
    %c0_37 = arith.constant 0 : index
    %c0_38 = arith.constant 0 : index
    %39 = vector.load %arg3[%c0_36, %c0_37, %c0_38] : memref<1x4x256xf32, #tpu.memory_space<vmem>>, vector<1x4x256xf32>
    tpu.vector_store %arg3[%c0_36, %c0_37, %c0_38], %38 {strides = array<i32>} : memref<1x4x256xf32, #tpu.memory_space<vmem>>, vector<1x4x256xf32>,
    return
  }
  func.func @transform_0(%arg0: i32) -> (i32, i32, i32, i32) {
    %c0_i32 = arith.constant 0 : i32
    %c0_i32_0 = arith.constant 0 : i32
    %c0_i32_1 = arith.constant 0 : i32
    %c0_i32_2 = arith.constant 0 : i32
    return %arg0, %c0_i32, %c0_i32_0, %c0_i32_1 : i32, i32, i32, i32
  }
  func.func @transform_1(%arg0: i32) -> (i32, i32) {
    %c0_i32 = arith.constant 0 : i32
    %c0_i32_0 = arith.constant 0 : i32
    %c0_i32_1 = arith.constant 0 : i32
    return %c0_i32, %c0_i32_0 : i32, i32
  }
  func.func @transform_2(%arg0: i32) -> (i32, i32, i32) {
    %c0_i32 = arith.constant 0 : i32
    %c0_i32_0 = arith.constant 0 : i32
    %c0_i32_1 = arith.constant 0 : i32
    return %arg0, %c0_i32, %c0_i32_0 : i32, i32, i32
  }
}

</mosaic_0001>

<llo_original>
// kernel: tpu_custom_call.1
$region0: #{tpu_custom_call.1}
  #allocation0 [shape = 'u32[]', space=smem, size = 0x4, offset = 0x4, fixed_abs, tag = 'smem constant byte address 0x4 - core index']
  #allocation1 [shape = 'u32[72,128]{1,0:T(1,128)}', space=vmem, size = 0x9000, scoped, tag = 'internal scratch']
  %s0 = inlined_call_operand.vmem [shape: f32[2,4,18,18], index: 0, kind: input, shape index: {}]
  %s1 = inlined_call_operand.vmem [shape: f32[8,36], index: 1, kind: input, shape index: {}]
  %s2 = inlined_call_operand.hbm [shape: f32[2,4,256], index: 2, kind: output, shape index: {}]
  %s3 = sld [smem:[#allocation0]]
  $region41: #{tpu_custom_call.1} parent=0
    _
  %s5 = ssub.s32 1, %s3
  %s6 = scalar_select 0, %s5, %s3
  $region1: #{tpu_custom_call.1} parent=0
    #allocation2 [shape = 'u8[8192]{0}', space=vmem, size = 0x2000, scoped, tag = 'output window, operand 0']
    #allocation3 [shape = 's32[2]{0}', space=sflag, size = 0x8, scoped, tag = 'scoped memory for tpu_custom_call.1']
    %7 = vsyncpa [#allocation3], 0
    %s8 = scalar_lea.sflag [#allocation3], 1
    %9 = vsyncpa %s8, 0
    loop: start=0, step=1, limit=4
    $region2: #{tpu_custom_call.1} parent=1 // loop_pre_header
      _
    $region3: #{tpu_custom_call.1} parent=1 // loop_header
      %s11 = sphi 0, %s15
      %p12 = scmp.ge.s32.totalorder %s11, 4
      %s21 = sphi 0, %s23
      %s24 = sphi 0, %s21
      %s25 = sphi 0, %s24
      %s41 = sphi 0, %s25
      %s45 = sphi 0, %s45
      %s47 = sphi 0, %s45
      %s48 = sphi 0, %s47
      %s62 = sphi 0, %s48
      %s68 = sphi 0, %s70
      %s71 = sphi 0, %s68
      %s72 = sphi 0, %s71
      %s88 = sphi 0, %s72
    $region4: #{tpu_custom_call.1} parent=1 // loop_header_branch
      %14 = sbr.rel (%p12) target = $region8
    $region5: #{tpu_custom_call.1} parent=1 // loop_body
      %s16 = ssub.s32 %s11, 1
      %s17 = ssub.s32 %s11, 2
      %s18 = sadd.s32 %s11, 1
      %s19 = ssub.s32 %s11, %s18
      %p20 = scmp.eq.s32.totalorder %s19, 0
      %s22 = sadd.s32 %s21, 1
      %s23 = scalar_select %p20, %s21, %s22
      %p26 = pneg %p20
      %p27 = scmp.eq.s32.totalorder %s11, 1
      %p28 = por %p26, %p27
      %p29 = scmp.ne.s32.totalorder %s21, %s24
      %p30 = scmp.eq.s32.totalorder %s11, 0
      %p31 = por %p29, %p30
      %p32 = scmp.ne.s32.totalorder %s21, %s24
      %p33 = scmp.eq.s32.totalorder %s16, 1
      %p34 = por %p32, %p33
      %p35 = scmp.ne.s32.totalorder %s24, %s25
      %p36 = scmp.eq.s32.totalorder %s16, 0
      %p37 = por %p35, %p36
      %p38 = scmp.ne.s32.totalorder %s24, %s25
      %p39 = scmp.eq.s32.totalorder %s17, 1
      %p40 = por %p38, %p39
      %p42 = scmp.ne.s32.totalorder %s25, %s41
      %p43 = scmp.eq.s32.totalorder %s17, 0
      %p44 = por %p42, %p43
      %s46 = sadd.s32 %s45, 1
      %p49 = scmp.eq.s32.totalorder %s11, 1
      %p50 = scmp.ne.s32.totalorder %s45, %s47
      %p51 = scmp.eq.s32.totalorder %s11, 0
      %p52 = por %p50, %p51
      %p53 = scmp.ne.s32.totalorder %s45, %s47
      %p54 = scmp.eq.s32.totalorder %s16, 1
      %p55 = por %p53, %p54
      %p56 = scmp.ne.s32.totalorder %s47, %s48
      %p57 = scmp.eq.s32.totalorder %s16, 0
      %p58 = por %p56, %p57
      %p59 = scmp.ne.s32.totalorder %s47, %s48
      %p60 = scmp.eq.s32.totalorder %s17, 1
      %p61 = por %p59, %p60
      %p63 = scmp.ne.s32.totalorder %s48, %s62
      %p64 = scmp.eq.s32.totalorder %s17, 0
      %p65 = por %p63, %p64
      %s66 = ssub.s32 %s11, %s18
      %p67 = scmp.eq.s32.totalorder %s66, 0
      %s69 = sadd.s32 %s68, 1
      %s70 = scalar_select %p67, %s68, %s69
      %p73 = pneg %p67
      %p74 = scmp.eq.s32.totalorder %s11, 1
      %p75 = por %p73, %p74
      %p76 = scmp.ne.s32.totalorder %s68, %s71
      %p77 = scmp.eq.s32.totalorder %s11, 0
      %p78 = por %p76, %p77
      %p79 = scmp.ne.s32.totalorder %s68, %s71
      %p80 = scmp.eq.s32.totalorder %s16, 1
      %p81 = por %p79, %p80
      %p82 = scmp.ne.s32.totalorder %s71, %s72
      %p83 = scmp.eq.s32.totalorder %s16, 0
      %p84 = por %p82, %p83
      %p85 = scmp.ne.s32.totalorder %s71, %s72
      %p86 = scmp.eq.s32.totalorder %s17, 1
      %p87 = por %p85, %p86
      %p89 = scmp.ne.s32.totalorder %s72, %s88
      %p90 = scmp.eq.s32.totalorder %s17, 0
      %p91 = por %p89, %p90
      %p92 = scmp.le.s32.totalorder 1, %s11
      %p93 = scmp.lt.s32.totalorder %s11, 3
      %p94 = pnand %p92, %p93
      %p95 = pneg %p94
      // Predicated region
      $region9: #{tpu_custom_call.1} parent=5 // pred_check
        _
      $region10: #{tpu_custom_call.1} parent=5 // pred_check_branch
        %97 = sbr.rel (%p94) target = $region12
      $region11: #{tpu_custom_call.1} parent=5 // pred_region
        %s98 = ssub.s32 %s11, 1
        // Predicated region
        $region13: #{tpu_custom_call.1} parent=11 // pred_check
          %p99 = pneg %p58
        $region14: #{tpu_custom_call.1} parent=11 // pred_check_branch
          %101 = sbr.rel (%p99) target = $region16
        $region15: #{tpu_custom_call.1} parent=11 // pred_region
          _
        $region16: #{tpu_custom_call.1} parent=11 // pred_fallthru
          _
      $region12: #{tpu_custom_call.1} parent=5 // pred_fallthru
        _
      %p102 = scmp.lt.s32.totalorder %s11, 2
      // Predicated region
      $region17: #{tpu_custom_call.1} parent=5 // pred_check
        %p103 = pneg %p102
      $region18: #{tpu_custom_call.1} parent=5 // pred_check_branch
        %105 = sbr.rel (%p103) target = $region20
      $region19: #{tpu_custom_call.1} parent=5 // pred_region
        // Predicated region
        $region21: #{tpu_custom_call.1} parent=19 // pred_check
          %p106 = pneg %p31
        $region22: #{tpu_custom_call.1} parent=19 // pred_check_branch
          %108 = sbr.rel (%p106) target = $region24
        $region23: #{tpu_custom_call.1} parent=19 // pred_region
          %p109 = scmp.lt.s32.totalorder %s11, 1
          %s110 = scalar_select %p109, %s11, 1
          %s111 = smul.addr %s110, 12
          %s112 = smul.addr %s111, 8
          %s113 = scalar_lea.vmem %s0, %s112
        $region24: #{tpu_custom_call.1} parent=19 // pred_fallthru
          _
      $region20: #{tpu_custom_call.1} parent=5 // pred_fallthru
        _
      %p114 = scmp.le.s32.totalorder 1, %s11
      %p115 = scmp.lt.s32.totalorder %s11, 3
      %p116 = pnand %p114, %p115
      %p117 = pneg %p116
      // Predicated region
      $region25: #{tpu_custom_call.1} parent=5 // pred_check
        _
      $region26: #{tpu_custom_call.1} parent=5 // pred_check_branch
        %119 = sbr.rel (%p116) target = $region28
      $region27: #{tpu_custom_call.1} parent=5 // pred_region
        %s120 = ssub.s32 %s11, 1
        %p121 = scmp.lt.s32.totalorder %s16, 1
        %s122 = scalar_select %p121, %s16, 1
        %s123 = smul.addr %s122, 12
        %s124 = smul.addr %s123, 8
        %s125 = scalar_lea.vmem %s0, %s124
        %p126 = pneg %p37
        %p127 = pneg %p34
        %p128 = pneg %p58
        %p129 = pneg %p55
        %p130 = pneg %p84
        %p131 = pneg %p81
        %s132 = sand.u32 %s71, 1
        %s133 = scalar_lea.sflag [#allocation3], %s132
        %s134 = sand.u32 %s71, 1
        %s135 = smul.addr %s134, 8
        %s136 = scalar_lea.vmem [#allocation2], %s135
        %p137 = scmp.lt.s32.totalorder %s16, 1
        %s138 = scalar_select %p137, %s16, 1
        %s139 = smul.addr %s138, 12
        %s140 = smul.addr %s139, 8
        %s141 = scalar_lea.vmem %s0, %s140
        %v142 = vld [vmem:[%s141] sm:$0xff]
        %v143 = vld [vmem:[%s141 + $0x8] sm:$0xff]
        %v144 = vld [vmem:[%s141 + $0x18] sm:$0xff]
        %v145 = vld [vmem:[%s141 + $0x20] sm:$0xff]
        %v146 = vld [vmem:[%s141 + $0x30] sm:$0xff]
        %v147 = vld [vmem:[%s141 + $0x38] sm:$0xff]
        %v148 = vld [vmem:[%s141 + $0x48] sm:$0xff]
        %v149 = vld [vmem:[%s141 + $0x50] sm:$0xff]
        %v150 = vrot.slane %v146, 4
        %vm151 = vcmask 1047556
        %v152 = vsel %vm151, %v150, %v142
        %v153 = vrot.slane %v142, 4
        %v154 = vsel %vm151, %v146, %v153
        %v156 = vunpack.c.l.s4 1983009808
        %v157 = vunpack.c.0.s8 %v156
        %v158 = vperm.slane %v152, %v157
        %v160 = vunpack.c.l.s4 1983009808
        %v161 = vunpack.c.0.s8 %v160
        %v162 = vperm.slane %v154, %v161
        %v163 = vrot.slane %v148, 4
        %v164 = vsel %vm151, %v163, %v144
        %v165 = vrot.slane %v144, 4
        %v166 = vsel %vm151, %v148, %v165
        %v168 = vunpack.c.l.s4 1983009808
        %v169 = vunpack.c.0.s8 %v168
        %v170 = vperm.slane %v164, %v169
        %v172 = vunpack.c.l.s4 1983009808
        %v173 = vunpack.c.0.s8 %v172
        %v174 = vperm.slane %v166, %v173
        %v175 = vrot.slane %v170, 4
        %v176 = vsel %vm151, %v175, %v158
        %v177 = vrot.slane %v158, 4
        %v178 = vsel %vm151, %v170, %v177
        %v180 = vunpack.c.l.s4 1934713408
        %v181 = vunpack.c.0.s8 %v180
        %v182 = vperm.slane %v176, %v181
        %v184 = vunpack.c.l.s4 1934713408
        %v185 = vunpack.c.0.s8 %v184
        %v186 = vperm.slane %v178, %v185
        %v187 = vrot.slane %v174, 4
        %v188 = vsel %vm151, %v187, %v162
        %v189 = vrot.slane %v162, 4
        %v190 = vsel %vm151, %v174, %v189
        %v192 = vunpack.c.l.s4 1934713408
        %v193 = vunpack.c.0.s8 %v192
        %v194 = vperm.slane %v188, %v193
        %v196 = vunpack.c.l.s4 1934713408
        %v197 = vunpack.c.0.s8 %v196
        %v198 = vperm.slane %v190, %v197
        %v199 = vrot.slane %v182, 4
        %v200 = vsel %vm151, 0.0, %v199
        %v201 = vrot.slane %v186, 4
        %v202 = vsel %vm151, 0.0, %v201
        %v203 = vrot.slane %v194, 4
        %v204 = vsel %vm151, 0.0, %v203
        %v205 = vrot.slane %v198, 4
        %v206 = vsel %vm151, 0.0, %v205
        %v207 = vrot.slane %v147, 4
        %v208 = vsel %vm151, %v207, %v143
        %v209 = vrot.slane %v143, 4
        %v210 = vsel %vm151, %v147, %v209
        %v212 = vunpack.c.l.s4 1983009808
        %v213 = vunpack.c.0.s8 %v212
        %v214 = vperm.slane %v208, %v213
        %v216 = vunpack.c.l.s4 1983009808
        %v217 = vunpack.c.0.s8 %v216
        %v218 = vperm.slane %v210, %v217
        %v219 = vrot.slane %v149, 4
        %v220 = vsel %vm151, %v219, %v145
        %v221 = vrot.slane %v145, 4
        %v222 = vsel %vm151, %v149, %v221
        %v224 = vunpack.c.l.s4 1983009808
        %v225 = vunpack.c.0.s8 %v224
        %v226 = vperm.slane %v220, %v225
        %v228 = vunpack.c.l.s4 1983009808
        %v229 = vunpack.c.0.s8 %v228
        %v230 = vperm.slane %v222, %v229
        %v231 = vrot.slane %v226, 4
        %v232 = vsel %vm151, %v231, %v214
        %v233 = vrot.slane %v214, 4
        %v234 = vsel %vm151, %v226, %v233
        %v236 = vunpack.c.l.s4 1934713408
        %v237 = vunpack.c.0.s8 %v236
        %v238 = vperm.slane %v232, %v237
        %v240 = vunpack.c.l.s4 1934713408
        %v241 = vunpack.c.0.s8 %v240
        %v242 = vperm.slane %v234, %v241
        %v243 = vrot.slane %v230, 4
        %v244 = vsel %vm151, %v243, %v218
        %v245 = vrot.slane %v218, 4
        %v246 = vsel %vm151, %v230, %v245
        %v248 = vunpack.c.l.s4 1934713408
        %v249 = vunpack.c.0.s8 %v248
        %v250 = vperm.slane %v244, %v249
        %v252 = vunpack.c.l.s4 1934713408
        %v253 = vunpack.c.0.s8 %v252
        %v254 = vperm.slane %v246, %v253
        %v255 = vrot.slane %v238, 4
        %v256 = vsel %vm151, 0.0, %v255
        %v257 = vrot.slane %v242, 4
        %v258 = vsel %vm151, 0.0, %v257
        %v259 = vrot.slane %v250, 4
        %v260 = vsel %vm151, 0.0, %v259
        %v261 = vrot.slane %v254, 4
        %v262 = vsel %vm151, 0.0, %v261
        %264 = vrot.lane.b32.xlu0 %v200, 16
        %v265 = vpop.permute.xlu0 %264
        %268 = vrot.lane.b32.xlu0 %v186, 32
        %v269 = vpop.permute.xlu0 %268
        %272 = vrot.lane.b32.xlu0 %v202, 48
        %v273 = vpop.permute.xlu0 %272
        %276 = vrot.lane.b32.xlu0 %v194, 64
        %v277 = vpop.permute.xlu0 %276
        %280 = vrot.lane.b32.xlu0 %v204, 80
        %v281 = vpop.permute.xlu0 %280
        %284 = vrot.lane.b32.xlu0 %v198, 96
        %v285 = vpop.permute.xlu0 %284
        %288 = vrot.lane.b32.xlu0 %v206, 112
        %v289 = vpop.permute.xlu0 %288
        %292 = vrot.lane.b32.xlu0 %v256, 16
        %v293 = vpop.permute.xlu0 %292
        %296 = vrot.lane.b32.xlu0 %v242, 32
        %v297 = vpop.permute.xlu0 %296
        %300 = vrot.lane.b32.xlu0 %v258, 48
        %v301 = vpop.permute.xlu0 %300
        %304 = vrot.lane.b32.xlu0 %v250, 64
        %v305 = vpop.permute.xlu0 %304
        %308 = vrot.lane.b32.xlu0 %v260, 80
        %v309 = vpop.permute.xlu0 %308
        %312 = vrot.lane.b32.xlu0 %v254, 96
        %v313 = vpop.permute.xlu0 %312
        %316 = vrot.lane.b32.xlu0 %v262, 112
        %v317 = vpop.permute.xlu0 %316
        %vm319 = vcmask 130048
        %v320 = vsel %vm319, %v182, %v265
        %vm321 = vcmask 261120
        %v322 = vsel %vm321, %v320, %v269
        %vm323 = vcmask 392192
        %v324 = vsel %vm323, %v322, %v273
        %vm325 = vcmask 523264
        %v326 = vsel %vm325, %v324, %v277
        %vm327 = vcmask 654336
        %v328 = vsel %vm327, %v326, %v281
        %vm329 = vcmask 785408
        %v330 = vsel %vm329, %v328, %v285
        %vm331 = vcmask 916480
        %v332 = vsel %vm331, %v330, %v289
        %v333 = vsel %vm319, %v238, %v293
        %v334 = vsel %vm321, %v333, %v297
        %v335 = vsel %vm323, %v334, %v301
        %v336 = vsel %vm325, %v335, %v305
        %v337 = vsel %vm327, %v336, %v309
        %v338 = vsel %vm329, %v337, %v313
        %v339 = vsel %vm331, %v338, %v317
        %348 = vrot.lane.b32.xlu0 %v142, 127
        %v349 = vpop.permute.xlu0 %348
        %350 = vrot.lane.b32.xlu0 %v143, 127
        %v351 = vpop.permute.xlu0 %350
        %352 = vrot.lane.b32.xlu0 %v144, 127
        %v353 = vpop.permute.xlu0 %352
        %354 = vrot.lane.b32.xlu0 %v145, 127
        %v355 = vpop.permute.xlu0 %354
        %356 = vrot.lane.b32.xlu0 %v146, 127
        %v357 = vpop.permute.xlu0 %356
        %358 = vrot.lane.b32.xlu0 %v147, 127
        %v359 = vpop.permute.xlu0 %358
        %360 = vrot.lane.b32.xlu0 %v148, 127
        %v361 = vpop.permute.xlu0 %360
        %362 = vrot.lane.b32.xlu0 %v149, 127
        %v363 = vpop.permute.xlu0 %362
        %v372 = vrot.slane %v357, 4
        %v373 = vsel %vm151, %v372, %v349
        %v374 = vrot.slane %v349, 4
        %v375 = vsel %vm151, %v357, %v374
        %v377 = vunpack.c.l.s4 1983009808
        %v378 = vunpack.c.0.s8 %v377
        %v379 = vperm.slane %v373, %v378
        %v381 = vunpack.c.l.s4 1983009808
        %v382 = vunpack.c.0.s8 %v381
        %v383 = vperm.slane %v375, %v382
        %v384 = vrot.slane %v361, 4
        %v385 = vsel %vm151, %v384, %v353
        %v386 = vrot.slane %v353, 4
        %v387 = vsel %vm151, %v361, %v386
        %v389 = vunpack.c.l.s4 1983009808
        %v390 = vunpack.c.0.s8 %v389
        %v391 = vperm.slane %v385, %v390
        %v393 = vunpack.c.l.s4 1983009808
        %v394 = vunpack.c.0.s8 %v393
        %v395 = vperm.slane %v387, %v394
        %v396 = vrot.slane %v391, 4
        %v397 = vsel %vm151, %v396, %v379
        %v398 = vrot.slane %v379, 4
        %v399 = vsel %vm151, %v391, %v398
        %v401 = vunpack.c.l.s4 1934713408
        %v402 = vunpack.c.0.s8 %v401
        %v403 = vperm.slane %v397, %v402
        %v405 = vunpack.c.l.s4 1934713408
        %v406 = vunpack.c.0.s8 %v405
        %v407 = vperm.slane %v399, %v406
        %v408 = vrot.slane %v395, 4
        %v409 = vsel %vm151, %v408, %v383
        %v410 = vrot.slane %v383, 4
        %v411 = vsel %vm151, %v395, %v410
        %v413 = vunpack.c.l.s4 1934713408
        %v414 = vunpack.c.0.s8 %v413
        %v415 = vperm.slane %v409, %v414
        %v417 = vunpack.c.l.s4 1934713408
        %v418 = vunpack.c.0.s8 %v417
        %v419 = vperm.slane %v411, %v418
        %v420 = vrot.slane %v403, 4
        %v421 = vsel %vm151, 0.0, %v420
        %v422 = vrot.slane %v407, 4
        %v423 = vsel %vm151, 0.0, %v422
        %v424 = vrot.slane %v415, 4
        %v425 = vsel %vm151, 0.0, %v424
        %v426 = vrot.slane %v419, 4
        %v427 = vsel %vm151, 0.0, %v426
        %v428 = vrot.slane %v359, 4
        %v429 = vsel %vm151, %v428, %v351
        %v430 = vrot.slane %v351, 4
        %v431 = vsel %vm151, %v359, %v430
        %v433 = vunpack.c.l.s4 1983009808
        %v434 = vunpack.c.0.s8 %v433
        %v435 = vperm.slane %v429, %v434
        %v437 = vunpack.c.l.s4 1983009808
        %v438 = vunpack.c.0.s8 %v437
        %v439 = vperm.slane %v431, %v438
        %v440 = vrot.slane %v363, 4
        %v441 = vsel %vm151, %v440, %v355
        %v442 = vrot.slane %v355, 4
        %v443 = vsel %vm151, %v363, %v442
        %v445 = vunpack.c.l.s4 1983009808
        %v446 = vunpack.c.0.s8 %v445
        %v447 = vperm.slane %v441, %v446
        %v449 = vunpack.c.l.s4 1983009808
        %v450 = vunpack.c.0.s8 %v449
        %v451 = vperm.slane %v443, %v450
        %v452 = vrot.slane %v447, 4
        %v453 = vsel %vm151, %v452, %v435
        %v454 = vrot.slane %v435, 4
        %v455 = vsel %vm151, %v447, %v454
        %v457 = vunpack.c.l.s4 1934713408
        %v458 = vunpack.c.0.s8 %v457
        %v459 = vperm.slane %v453, %v458
        %v461 = vunpack.c.l.s4 1934713408
        %v462 = vunpack.c.0.s8 %v461
        %v463 = vperm.slane %v455, %v462
        %v464 = vrot.slane %v451, 4
        %v465 = vsel %vm151, %v464, %v439
        %v466 = vrot.slane %v439, 4
        %v467 = vsel %vm151, %v451, %v466
        %v469 = vunpack.c.l.s4 1934713408
        %v470 = vunpack.c.0.s8 %v469
        %v471 = vperm.slane %v465, %v470
        %v473 = vunpack.c.l.s4 1934713408
        %v474 = vunpack.c.0.s8 %v473
        %v475 = vperm.slane %v467, %v474
        %v476 = vrot.slane %v459, 4
        %v477 = vsel %vm151, 0.0, %v476
        %v478 = vrot.slane %v463, 4
        %v479 = vsel %vm151, 0.0, %v478
        %v480 = vrot.slane %v471, 4
        %v481 = vsel %vm151, 0.0, %v480
        %v482 = vrot.slane %v475, 4
        %v483 = vsel %vm151, 0.0, %v482
        %485 = vrot.lane.b32.xlu0 %v421, 16
        %v486 = vpop.permute.xlu0 %485
        %489 = vrot.lane.b32.xlu0 %v407, 32
        %v490 = vpop.permute.xlu0 %489
        %493 = vrot.lane.b32.xlu0 %v423, 48
        %v494 = vpop.permute.xlu0 %493
        %497 = vrot.lane.b32.xlu0 %v415, 64
        %v498 = vpop.permute.xlu0 %497
        %501 = vrot.lane.b32.xlu0 %v425, 80
        %v502 = vpop.permute.xlu0 %501
        %505 = vrot.lane.b32.xlu0 %v419, 96
        %v506 = vpop.permute.xlu0 %505
        %509 = vrot.lane.b32.xlu0 %v427, 112
        %v510 = vpop.permute.xlu0 %509
        %513 = vrot.lane.b32.xlu0 %v477, 16
        %v514 = vpop.permute.xlu0 %513
        %517 = vrot.lane.b32.xlu0 %v463, 32
        %v518 = vpop.permute.xlu0 %517
        %521 = vrot.lane.b32.xlu0 %v479, 48
        %v522 = vpop.permute.xlu0 %521
        %525 = vrot.lane.b32.xlu0 %v471, 64
        %v526 = vpop.permute.xlu0 %525
        %529 = vrot.lane.b32.xlu0 %v481, 80
        %v530 = vpop.permute.xlu0 %529
        %533 = vrot.lane.b32.xlu0 %v475, 96
        %v534 = vpop.permute.xlu0 %533
        %537 = vrot.lane.b32.xlu0 %v483, 112
        %v538 = vpop.permute.xlu0 %537
        %v540 = vsel %vm319, %v403, %v486
        %v541 = vsel %vm321, %v540, %v490
        %v542 = vsel %vm323, %v541, %v494
        %v543 = vsel %vm325, %v542, %v498
        %v544 = vsel %vm327, %v543, %v502
        %v545 = vsel %vm329, %v544, %v506
        %v546 = vsel %vm331, %v545, %v510
        %v547 = vsel %vm319, %v459, %v514
        %v548 = vsel %vm321, %v547, %v518
        %v549 = vsel %vm323, %v548, %v522
        %v550 = vsel %vm325, %v549, %v526
        %v551 = vsel %vm327, %v550, %v530
        %v552 = vsel %vm329, %v551, %v534
        %v553 = vsel %vm331, %v552, %v538
        %554 = vrot.lane.b32.xlu0 %v142, 126
        %v555 = vpop.permute.xlu0 %554
        %556 = vrot.lane.b32.xlu0 %v143, 126
        %v557 = vpop.permute.xlu0 %556
        %558 = vrot.lane.b32.xlu0 %v144, 126
        %v559 = vpop.permute.xlu0 %558
        %560 = vrot.lane.b32.xlu0 %v145, 126
        %v561 = vpop.permute.xlu0 %560
        %562 = vrot.lane.b32.xlu0 %v146, 126
        %v563 = vpop.permute.xlu0 %562
        %564 = vrot.lane.b32.xlu0 %v147, 126
        %v565 = vpop.permute.xlu0 %564
        %566 = vrot.lane.b32.xlu0 %v148, 126
        %v567 = vpop.permute.xlu0 %566
        %568 = vrot.lane.b32.xlu0 %v149, 126
        %v569 = vpop.permute.xlu0 %568
        %v578 = vrot.slane %v563, 4
        %v579 = vsel %vm151, %v578, %v555
        %v580 = vrot.slane %v555, 4
        %v581 = vsel %vm151, %v563, %v580
        %v583 = vunpack.c.l.s4 1983009808
        %v584 = vunpack.c.0.s8 %v583
        %v585 = vperm.slane %v579, %v584
        %v587 = vunpack.c.l.s4 1983009808
        %v588 = vunpack.c.0.s8 %v587
        %v589 = vperm.slane %v581, %v588
        %v590 = vrot.slane %v567, 4
        %v591 = vsel %vm151, %v590, %v559
        %v592 = vrot.slane %v559, 4
        %v593 = vsel %vm151, %v567, %v592
        %v595 = vunpack.c.l.s4 1983009808
        %v596 = vunpack.c.0.s8 %v595
        %v597 = vperm.slane %v591, %v596
        %v599 = vunpack.c.l.s4 1983009808
        %v600 = vunpack.c.0.s8 %v599
        %v601 = vperm.slane %v593, %v600
        %v602 = vrot.slane %v597, 4
        %v603 = vsel %vm151, %v602, %v585
        %v604 = vrot.slane %v585, 4
        %v605 = vsel %vm151, %v597, %v604
        %v607 = vunpack.c.l.s4 1934713408
        %v608 = vunpack.c.0.s8 %v607
        %v609 = vperm.slane %v603, %v608
        %v611 = vunpack.c.l.s4 1934713408
        %v612 = vunpack.c.0.s8 %v611
        %v613 = vperm.slane %v605, %v612
        %v614 = vrot.slane %v601, 4
        %v615 = vsel %vm151, %v614, %v589
        %v616 = vrot.slane %v589, 4
        %v617 = vsel %vm151, %v601, %v616
        %v619 = vunpack.c.l.s4 1934713408
        %v620 = vunpack.c.0.s8 %v619
        %v621 = vperm.slane %v615, %v620
        %v623 = vunpack.c.l.s4 1934713408
        %v624 = vunpack.c.0.s8 %v623
        %v625 = vperm.slane %v617, %v624
        %v626 = vrot.slane %v609, 4
        %v627 = vsel %vm151, 0.0, %v626
        %v628 = vrot.slane %v613, 4
        %v629 = vsel %vm151, 0.0, %v628
        %v630 = vrot.slane %v621, 4
        %v631 = vsel %vm151, 0.0, %v630
        %v632 = vrot.slane %v625, 4
        %v633 = vsel %vm151, 0.0, %v632
        %v634 = vrot.slane %v565, 4
        %v635 = vsel %vm151, %v634, %v557
        %v636 = vrot.slane %v557, 4
        %v637 = vsel %vm151, %v565, %v636
        %v639 = vunpack.c.l.s4 1983009808
        %v640 = vunpack.c.0.s8 %v639
        %v641 = vperm.slane %v635, %v640
        %v643 = vunpack.c.l.s4 1983009808
        %v644 = vunpack.c.0.s8 %v643
        %v645 = vperm.slane %v637, %v644
        %v646 = vrot.slane %v569, 4
        %v647 = vsel %vm151, %v646, %v561
        %v648 = vrot.slane %v561, 4
        %v649 = vsel %vm151, %v569, %v648
        %v651 = vunpack.c.l.s4 1983009808
        %v652 = vunpack.c.0.s8 %v651
        %v653 = vperm.slane %v647, %v652
        %v655 = vunpack.c.l.s4 1983009808
        %v656 = vunpack.c.0.s8 %v655
        %v657 = vperm.slane %v649, %v656
        %v658 = vrot.slane %v653, 4
        %v659 = vsel %vm151, %v658, %v641
        %v660 = vrot.slane %v641, 4
        %v661 = vsel %vm151, %v653, %v660
        %v663 = vunpack.c.l.s4 1934713408
        %v664 = vunpack.c.0.s8 %v663
        %v665 = vperm.slane %v659, %v664
        %v667 = vunpack.c.l.s4 1934713408
        %v668 = vunpack.c.0.s8 %v667
        %v669 = vperm.slane %v661, %v668
        %v670 = vrot.slane %v657, 4
        %v671 = vsel %vm151, %v670, %v645
        %v672 = vrot.slane %v645, 4
        %v673 = vsel %vm151, %v657, %v672
        %v675 = vunpack.c.l.s4 1934713408
        %v676 = vunpack.c.0.s8 %v675
        %v677 = vperm.slane %v671, %v676
        %v679 = vunpack.c.l.s4 1934713408
        %v680 = vunpack.c.0.s8 %v679
        %v681 = vperm.slane %v673, %v680
        %v682 = vrot.slane %v665, 4
        %v683 = vsel %vm151, 0.0, %v682
        %v684 = vrot.slane %v669, 4
        %v685 = vsel %vm151, 0.0, %v684
        %v686 = vrot.slane %v677, 4
        %v687 = vsel %vm151, 0.0, %v686
        %v688 = vrot.slane %v681, 4
        %v689 = vsel %vm151, 0.0, %v688
        %691 = vrot.lane.b32.xlu0 %v627, 16
        %v692 = vpop.permute.xlu0 %691
        %695 = vrot.lane.b32.xlu0 %v613, 32
        %v696 = vpop.permute.xlu0 %695
        %699 = vrot.lane.b32.xlu0 %v629, 48
        %v700 = vpop.permute.xlu0 %699
        %703 = vrot.lane.b32.xlu0 %v621, 64
        %v704 = vpop.permute.xlu0 %703
        %707 = vrot.lane.b32.xlu0 %v631, 80
        %v708 = vpop.permute.xlu0 %707
        %711 = vrot.lane.b32.xlu0 %v625, 96
        %v712 = vpop.permute.xlu0 %711
        %715 = vrot.lane.b32.xlu0 %v633, 112
        %v716 = vpop.permute.xlu0 %715
        %719 = vrot.lane.b32.xlu0 %v683, 16
        %v720 = vpop.permute.xlu0 %719
        %723 = vrot.lane.b32.xlu0 %v669, 32
        %v724 = vpop.permute.xlu0 %723
        %727 = vrot.lane.b32.xlu0 %v685, 48
        %v728 = vpop.permute.xlu0 %727
        %731 = vrot.lane.b32.xlu0 %v677, 64
        %v732 = vpop.permute.xlu0 %731
        %735 = vrot.lane.b32.xlu0 %v687, 80
        %v736 = vpop.permute.xlu0 %735
        %739 = vrot.lane.b32.xlu0 %v681, 96
        %v740 = vpop.permute.xlu0 %739
        %743 = vrot.lane.b32.xlu0 %v689, 112
        %v744 = vpop.permute.xlu0 %743
        %v746 = vsel %vm319, %v609, %v692
        %v747 = vsel %vm321, %v746, %v696
        %v748 = vsel %vm323, %v747, %v700
        %v749 = vsel %vm325, %v748, %v704
        %v750 = vsel %vm327, %v749, %v708
        %v751 = vsel %vm329, %v750, %v712
        %v752 = vsel %vm331, %v751, %v716
        %v753 = vsel %vm319, %v665, %v720
        %v754 = vsel %vm321, %v753, %v724
        %v755 = vsel %vm323, %v754, %v728
        %v756 = vsel %vm325, %v755, %v732
        %v757 = vsel %vm327, %v756, %v736
        %v758 = vsel %vm329, %v757, %v740
        %v759 = vsel %vm331, %v758, %v744
        %v760 = vld [vmem:[%s141 + $0x1] sm:$0xff]
        %v761 = vld [vmem:[%s141 + $0x9] sm:$0xff]
        %v762 = vld [vmem:[%s141 + $0x19] sm:$0xff]
        %v763 = vld [vmem:[%s141 + $0x21] sm:$0xff]
        %v764 = vld [vmem:[%s141 + $0x31] sm:$0xff]
        %v765 = vld [vmem:[%s141 + $0x39] sm:$0xff]
        %v766 = vld [vmem:[%s141 + $0x49] sm:$0xff]
        %v767 = vld [vmem:[%s141 + $0x51] sm:$0xff]
        %v768 = vrot.slane %v764, 4
        %v769 = vsel %vm151, %v768, %v760
        %v770 = vrot.slane %v760, 4
        %v771 = vsel %vm151, %v764, %v770
        %v773 = vunpack.c.l.s4 1983009808
        %v774 = vunpack.c.0.s8 %v773
        %v775 = vperm.slane %v769, %v774
        %v777 = vunpack.c.l.s4 1983009808
        %v778 = vunpack.c.0.s8 %v777
        %v779 = vperm.slane %v771, %v778
        %v780 = vrot.slane %v766, 4
        %v781 = vsel %vm151, %v780, %v762
        %v782 = vrot.slane %v762, 4
        %v783 = vsel %vm151, %v766, %v782
        %v785 = vunpack.c.l.s4 1983009808
        %v786 = vunpack.c.0.s8 %v785
        %v787 = vperm.slane %v781, %v786
        %v789 = vunpack.c.l.s4 1983009808
        %v790 = vunpack.c.0.s8 %v789
        %v791 = vperm.slane %v783, %v790
        %v792 = vrot.slane %v787, 4
        %v793 = vsel %vm151, %v792, %v775
        %v794 = vrot.slane %v775, 4
        %v795 = vsel %vm151, %v787, %v794
        %v797 = vunpack.c.l.s4 1934713408
        %v798 = vunpack.c.0.s8 %v797
        %v799 = vperm.slane %v793, %v798
        %v801 = vunpack.c.l.s4 1934713408
        %v802 = vunpack.c.0.s8 %v801
        %v803 = vperm.slane %v795, %v802
        %v804 = vrot.slane %v791, 4
        %v805 = vsel %vm151, %v804, %v779
        %v806 = vrot.slane %v779, 4
        %v807 = vsel %vm151, %v791, %v806
        %v809 = vunpack.c.l.s4 1934713408
        %v810 = vunpack.c.0.s8 %v809
        %v811 = vperm.slane %v805, %v810
        %v813 = vunpack.c.l.s4 1934713408
        %v814 = vunpack.c.0.s8 %v813
        %v815 = vperm.slane %v807, %v814
        %v816 = vrot.slane %v799, 4
        %v817 = vsel %vm151, 0.0, %v816
        %v818 = vrot.slane %v803, 4
        %v819 = vsel %vm151, 0.0, %v818
        %v820 = vrot.slane %v811, 4
        %v821 = vsel %vm151, 0.0, %v820
        %v822 = vrot.slane %v815, 4
        %v823 = vsel %vm151, 0.0, %v822
        %v824 = vrot.slane %v765, 4
        %v825 = vsel %vm151, %v824, %v761
        %v826 = vrot.slane %v761, 4
        %v827 = vsel %vm151, %v765, %v826
        %v829 = vunpack.c.l.s4 1983009808
        %v830 = vunpack.c.0.s8 %v829
        %v831 = vperm.slane %v825, %v830
        %v833 = vunpack.c.l.s4 1983009808
        %v834 = vunpack.c.0.s8 %v833
        %v835 = vperm.slane %v827, %v834
        %v836 = vrot.slane %v767, 4
        %v837 = vsel %vm151, %v836, %v763
        %v838 = vrot.slane %v763, 4
        %v839 = vsel %vm151, %v767, %v838
        %v841 = vunpack.c.l.s4 1983009808
        %v842 = vunpack.c.0.s8 %v841
        %v843 = vperm.slane %v837, %v842
        %v845 = vunpack.c.l.s4 1983009808
        %v846 = vunpack.c.0.s8 %v845
        %v847 = vperm.slane %v839, %v846
        %v848 = vrot.slane %v843, 4
        %v849 = vsel %vm151, %v848, %v831
        %v850 = vrot.slane %v831, 4
        %v851 = vsel %vm151, %v843, %v850
        %v853 = vunpack.c.l.s4 1934713408
        %v854 = vunpack.c.0.s8 %v853
        %v855 = vperm.slane %v849, %v854
        %v857 = vunpack.c.l.s4 1934713408
        %v858 = vunpack.c.0.s8 %v857
        %v859 = vperm.slane %v851, %v858
        %v860 = vrot.slane %v847, 4
        %v861 = vsel %vm151, %v860, %v835
        %v862 = vrot.slane %v835, 4
        %v863 = vsel %vm151, %v847, %v862
        %v865 = vunpack.c.l.s4 1934713408
        %v866 = vunpack.c.0.s8 %v865
        %v867 = vperm.slane %v861, %v866
        %v869 = vunpack.c.l.s4 1934713408
        %v870 = vunpack.c.0.s8 %v869
        %v871 = vperm.slane %v863, %v870
        %v872 = vrot.slane %v855, 4
        %v873 = vsel %vm151, 0.0, %v872
        %v874 = vrot.slane %v859, 4
        %v875 = vsel %vm151, 0.0, %v874
        %v876 = vrot.slane %v867, 4
        %v877 = vsel %vm151, 0.0, %v876
        %v878 = vrot.slane %v871, 4
        %v879 = vsel %vm151, 0.0, %v878
        %881 = vrot.lane.b32.xlu0 %v817, 16
        %v882 = vpop.permute.xlu0 %881
        %885 = vrot.lane.b32.xlu0 %v803, 32
        %v886 = vpop.permute.xlu0 %885
        %889 = vrot.lane.b32.xlu0 %v819, 48
        %v890 = vpop.permute.xlu0 %889
        %893 = vrot.lane.b32.xlu0 %v811, 64
        %v894 = vpop.permute.xlu0 %893
        %897 = vrot.lane.b32.xlu0 %v821, 80
        %v898 = vpop.permute.xlu0 %897
        %901 = vrot.lane.b32.xlu0 %v815, 96
        %v902 = vpop.permute.xlu0 %901
        %905 = vrot.lane.b32.xlu0 %v823, 112
        %v906 = vpop.permute.xlu0 %905
        %909 = vrot.lane.b32.xlu0 %v873, 16
        %v910 = vpop.permute.xlu0 %909
        %913 = vrot.lane.b32.xlu0 %v859, 32
        %v914 = vpop.permute.xlu0 %913
        %917 = vrot.lane.b32.xlu0 %v875, 48
        %v918 = vpop.permute.xlu0 %917
        %921 = vrot.lane.b32.xlu0 %v867, 64
        %v922 = vpop.permute.xlu0 %921
        %925 = vrot.lane.b32.xlu0 %v877, 80
        %v926 = vpop.permute.xlu0 %925
        %929 = vrot.lane.b32.xlu0 %v871, 96
        %v930 = vpop.permute.xlu0 %929
        %933 = vrot.lane.b32.xlu0 %v879, 112
        %v934 = vpop.permute.xlu0 %933
        %v936 = vsel %vm319, %v799, %v882
        %v937 = vsel %vm321, %v936, %v886
        %v938 = vsel %vm323, %v937, %v890
        %v939 = vsel %vm325, %v938, %v894
        %v940 = vsel %vm327, %v939, %v898
        %v941 = vsel %vm329, %v940, %v902
        %v942 = vsel %vm331, %v941, %v906
        %v943 = vsel %vm319, %v855, %v910
        %v944 = vsel %vm321, %v943, %v914
        %v945 = vsel %vm323, %v944, %v918
        %v946 = vsel %vm325, %v945, %v922
        %v947 = vsel %vm327, %v946, %v926
        %v948 = vsel %vm329, %v947, %v930
        %v949 = vsel %vm331, %v948, %v934
        %958 = vrot.lane.b32.xlu0 %v760, 127
        %v959 = vpop.permute.xlu0 %958
        %960 = vrot.lane.b32.xlu0 %v761, 127
        %v961 = vpop.permute.xlu0 %960
        %962 = vrot.lane.b32.xlu0 %v762, 127
        %v963 = vpop.permute.xlu0 %962
        %964 = vrot.lane.b32.xlu0 %v763, 127
        %v965 = vpop.permute.xlu0 %964
        %966 = vrot.lane.b32.xlu0 %v764, 127
        %v967 = vpop.permute.xlu0 %966
        %968 = vrot.lane.b32.xlu0 %v765, 127
        %v969 = vpop.permute.xlu0 %968
        %970 = vrot.lane.b32.xlu0 %v766, 127
        %v971 = vpop.permute.xlu0 %970
        %972 = vrot.lane.b32.xlu0 %v767, 127
        %v973 = vpop.permute.xlu0 %972
        %v982 = vrot.slane %v967, 4
        %v983 = vsel %vm151, %v982, %v959
        %v984 = vrot.slane %v959, 4
        %v985 = vsel %vm151, %v967, %v984
        %v987 = vunpack.c.l.s4 1983009808
        %v988 = vunpack.c.0.s8 %v987
        %v989 = vperm.slane %v983, %v988
        %v991 = vunpack.c.l.s4 1983009808
        %v992 = vunpack.c.0.s8 %v991
        %v993 = vperm.slane %v985, %v992
        %v994 = vrot.slane %v971, 4
        %v995 = vsel %vm151, %v994, %v963
        %v996 = vrot.slane %v963, 4
        %v997 = vsel %vm151, %v971, %v996
        %v999 = vunpack.c.l.s4 1983009808
        %v1000 = vunpack.c.0.s8 %v999
        %v1001 = vperm.slane %v995, %v1000
        %v1003 = vunpack.c.l.s4 1983009808
        %v1004 = vunpack.c.0.s8 %v1003
        %v1005 = vperm.slane %v997, %v1004
        %v1006 = vrot.slane %v1001, 4
        %v1007 = vsel %vm151, %v1006, %v989
        %v1008 = vrot.slane %v989, 4
        %v1009 = vsel %vm151, %v1001, %v1008
        %v1011 = vunpack.c.l.s4 1934713408
        %v1012 = vunpack.c.0.s8 %v1011
        %v1013 = vperm.slane %v1007, %v1012
        %v1015 = vunpack.c.l.s4 1934713408
        %v1016 = vunpack.c.0.s8 %v1015
        %v1017 = vperm.slane %v1009, %v1016
        %v1018 = vrot.slane %v1005, 4
        %v1019 = vsel %vm151, %v1018, %v993
        %v1020 = vrot.slane %v993, 4
        %v1021 = vsel %vm151, %v1005, %v1020
        %v1023 = vunpack.c.l.s4 1934713408
        %v1024 = vunpack.c.0.s8 %v1023
        %v1025 = vperm.slane %v1019, %v1024
        %v1027 = vunpack.c.l.s4 1934713408
        %v1028 = vunpack.c.0.s8 %v1027
        %v1029 = vperm.slane %v1021, %v1028
        %v1030 = vrot.slane %v1013, 4
        %v1031 = vsel %vm151, 0.0, %v1030
        %v1032 = vrot.slane %v1017, 4
        %v1033 = vsel %vm151, 0.0, %v1032
        %v1034 = vrot.slane %v1025, 4
        %v1035 = vsel %vm151, 0.0, %v1034
        %v1036 = vrot.slane %v1029, 4
        %v1037 = vsel %vm151, 0.0, %v1036
        %v1038 = vrot.slane %v969, 4
        %v1039 = vsel %vm151, %v1038, %v961
        %v1040 = vrot.slane %v961, 4
        %v1041 = vsel %vm151, %v969, %v1040
        %v1043 = vunpack.c.l.s4 1983009808
        %v1044 = vunpack.c.0.s8 %v1043
        %v1045 = vperm.slane %v1039, %v1044
        %v1047 = vunpack.c.l.s4 1983009808
        %v1048 = vunpack.c.0.s8 %v1047
        %v1049 = vperm.slane %v1041, %v1048
        %v1050 = vrot.slane %v973, 4
        %v1051 = vsel %vm151, %v1050, %v965
        %v1052 = vrot.slane %v965, 4
        %v1053 = vsel %vm151, %v973, %v1052
        %v1055 = vunpack.c.l.s4 1983009808
        %v1056 = vunpack.c.0.s8 %v1055
        %v1057 = vperm.slane %v1051, %v1056
        %v1059 = vunpack.c.l.s4 1983009808
        %v1060 = vunpack.c.0.s8 %v1059
        %v1061 = vperm.slane %v1053, %v1060
        %v1062 = vrot.slane %v1057, 4
        %v1063 = vsel %vm151, %v1062, %v1045
        %v1064 = vrot.slane %v1045, 4
        %v1065 = vsel %vm151, %v1057, %v1064
        %v1067 = vunpack.c.l.s4 1934713408
        %v1068 = vunpack.c.0.s8 %v1067
        %v1069 = vperm.slane %v1063, %v1068
        %v1071 = vunpack.c.l.s4 1934713408
        %v1072 = vunpack.c.0.s8 %v1071
        %v1073 = vperm.slane %v1065, %v1072
        %v1074 = vrot.slane %v1061, 4
        %v1075 = vsel %vm151, %v1074, %v1049
        %v1076 = vrot.slane %v1049, 4
        %v1077 = vsel %vm151, %v1061, %v1076
        %v1079 = vunpack.c.l.s4 1934713408
        %v1080 = vunpack.c.0.s8 %v1079
        %v1081 = vperm.slane %v1075, %v1080
        %v1083 = vunpack.c.l.s4 1934713408
        %v1084 = vunpack.c.0.s8 %v1083
        %v1085 = vperm.slane %v1077, %v1084
        %v1086 = vrot.slane %v1069, 4
        %v1087 = vsel %vm151, 0.0, %v1086
        %v1088 = vrot.slane %v1073, 4
        %v1089 = vsel %vm151, 0.0, %v1088
        %v1090 = vrot.slane %v1081, 4
        %v1091 = vsel %vm151, 0.0, %v1090
        %v1092 = vrot.slane %v1085, 4
        %v1093 = vsel %vm151, 0.0, %v1092
        %1095 = vrot.lane.b32.xlu0 %v1031, 16
        %v1096 = vpop.permute.xlu0 %1095
        %1099 = vrot.lane.b32.xlu0 %v1017, 32
        %v1100 = vpop.permute.xlu0 %1099
        %1103 = vrot.lane.b32.xlu0 %v1033, 48
        %v1104 = vpop.permute.xlu0 %1103
        %1107 = vrot.lane.b32.xlu0 %v1025, 64
        %v1108 = vpop.permute.xlu0 %1107
        %1111 = vrot.lane.b32.xlu0 %v1035, 80
        %v1112 = vpop.permute.xlu0 %1111
        %1115 = vrot.lane.b32.xlu0 %v1029, 96
        %v1116 = vpop.permute.xlu0 %1115
        %1119 = vrot.lane.b32.xlu0 %v1037, 112
        %v1120 = vpop.permute.xlu0 %1119
        %1123 = vrot.lane.b32.xlu0 %v1087, 16
        %v1124 = vpop.permute.xlu0 %1123
        %1127 = vrot.lane.b32.xlu0 %v1073, 32
        %v1128 = vpop.permute.xlu0 %1127
        %1131 = vrot.lane.b32.xlu0 %v1089, 48
        %v1132 = vpop.permute.xlu0 %1131
        %1135 = vrot.lane.b32.xlu0 %v1081, 64
        %v1136 = vpop.permute.xlu0 %1135
        %1139 = vrot.lane.b32.xlu0 %v1091, 80
        %v1140 = vpop.permute.xlu0 %1139
        %1143 = vrot.lane.b32.xlu0 %v1085, 96
        %v1144 = vpop.permute.xlu0 %1143
        %1147 = vrot.lane.b32.xlu0 %v1093, 112
        %v1148 = vpop.permute.xlu0 %1147
        %v1150 = vsel %vm319, %v1013, %v1096
        %v1151 = vsel %vm321, %v1150, %v1100
        %v1152 = vsel %vm323, %v1151, %v1104
        %v1153 = vsel %vm325, %v1152, %v1108
        %v1154 = vsel %vm327, %v1153, %v1112
        %v1155 = vsel %vm329, %v1154, %v1116
        %v1156 = vsel %vm331, %v1155, %v1120
        %v1157 = vsel %vm319, %v1069, %v1124
        %v1158 = vsel %vm321, %v1157, %v1128
        %v1159 = vsel %vm323, %v1158, %v1132
        %v1160 = vsel %vm325, %v1159, %v1136
        %v1161 = vsel %vm327, %v1160, %v1140
        %v1162 = vsel %vm329, %v1161, %v1144
        %v1163 = vsel %vm331, %v1162, %v1148
        %1164 = vrot.lane.b32.xlu0 %v760, 126
        %v1165 = vpop.permute.xlu0 %1164
        %1166 = vrot.lane.b32.xlu0 %v761, 126
        %v1167 = vpop.permute.xlu0 %1166
        %1168 = vrot.lane.b32.xlu0 %v762, 126
        %v1169 = vpop.permute.xlu0 %1168
        %1170 = vrot.lane.b32.xlu0 %v763, 126
        %v1171 = vpop.permute.xlu0 %1170
        %1172 = vrot.lane.b32.xlu0 %v764, 126
        %v1173 = vpop.permute.xlu0 %1172
        %1174 = vrot.lane.b32.xlu0 %v765, 126
        %v1175 = vpop.permute.xlu0 %1174
        %1176 = vrot.lane.b32.xlu0 %v766, 126
        %v1177 = vpop.permute.xlu0 %1176
        %1178 = vrot.lane.b32.xlu0 %v767, 126
        %v1179 = vpop.permute.xlu0 %1178
        %v1188 = vrot.slane %v1173, 4
        %v1189 = vsel %vm151, %v1188, %v1165
        %v1190 = vrot.slane %v1165, 4
        %v1191 = vsel %vm151, %v1173, %v1190
        %v1193 = vunpack.c.l.s4 1983009808
        %v1194 = vunpack.c.0.s8 %v1193
        %v1195 = vperm.slane %v1189, %v1194
        %v1197 = vunpack.c.l.s4 1983009808
        %v1198 = vunpack.c.0.s8 %v1197
        %v1199 = vperm.slane %v1191, %v1198
        %v1200 = vrot.slane %v1177, 4
        %v1201 = vsel %vm151, %v1200, %v1169
        %v1202 = vrot.slane %v1169, 4
        %v1203 = vsel %vm151, %v1177, %v1202
        %v1205 = vunpack.c.l.s4 1983009808
        %v1206 = vunpack.c.0.s8 %v1205
        %v1207 = vperm.slane %v1201, %v1206
        %v1209 = vunpack.c.l.s4 1983009808
        %v1210 = vunpack.c.0.s8 %v1209
        %v1211 = vperm.slane %v1203, %v1210
        %v1212 = vrot.slane %v1207, 4
        %v1213 = vsel %vm151, %v1212, %v1195
        %v1214 = vrot.slane %v1195, 4
        %v1215 = vsel %vm151, %v1207, %v1214
        %v1217 = vunpack.c.l.s4 1934713408
        %v1218 = vunpack.c.0.s8 %v1217
        %v1219 = vperm.slane %v1213, %v1218
        %v1221 = vunpack.c.l.s4 1934713408
        %v1222 = vunpack.c.0.s8 %v1221
        %v1223 = vperm.slane %v1215, %v1222
        %v1224 = vrot.slane %v1211, 4
        %v1225 = vsel %vm151, %v1224, %v1199
        %v1226 = vrot.slane %v1199, 4
        %v1227 = vsel %vm151, %v1211, %v1226
        %v1229 = vunpack.c.l.s4 1934713408
        %v1230 = vunpack.c.0.s8 %v1229
        %v1231 = vperm.slane %v1225, %v1230
        %v1233 = vunpack.c.l.s4 1934713408
        %v1234 = vunpack.c.0.s8 %v1233
        %v1235 = vperm.slane %v1227, %v1234
        %v1236 = vrot.slane %v1219, 4
        %v1237 = vsel %vm151, 0.0, %v1236
        %v1238 = vrot.slane %v1223, 4
        %v1239 = vsel %vm151, 0.0, %v1238
        %v1240 = vrot.slane %v1231, 4
        %v1241 = vsel %vm151, 0.0, %v1240
        %v1242 = vrot.slane %v1235, 4
        %v1243 = vsel %vm151, 0.0, %v1242
        %v1244 = vrot.slane %v1175, 4
        %v1245 = vsel %vm151, %v1244, %v1167
        %v1246 = vrot.slane %v1167, 4
        %v1247 = vsel %vm151, %v1175, %v1246
        %v1249 = vunpack.c.l.s4 1983009808
        %v1250 = vunpack.c.0.s8 %v1249
        %v1251 = vperm.slane %v1245, %v1250
        %v1253 = vunpack.c.l.s4 1983009808
        %v1254 = vunpack.c.0.s8 %v1253
        %v1255 = vperm.slane %v1247, %v1254
        %v1256 = vrot.slane %v1179, 4
        %v1257 = vsel %vm151, %v1256, %v1171
        %v1258 = vrot.slane %v1171, 4
        %v1259 = vsel %vm151, %v1179, %v1258
        %v1261 = vunpack.c.l.s4 1983009808
        %v1262 = vunpack.c.0.s8 %v1261
        %v1263 = vperm.slane %v1257, %v1262
        %v1265 = vunpack.c.l.s4 1983009808
        %v1266 = vunpack.c.0.s8 %v1265
        %v1267 = vperm.slane %v1259, %v1266
        %v1268 = vrot.slane %v1263, 4
        %v1269 = vsel %vm151, %v1268, %v1251
        %v1270 = vrot.slane %v1251, 4
        %v1271 = vsel %vm151, %v1263, %v1270
        %v1273 = vunpack.c.l.s4 1934713408
        %v1274 = vunpack.c.0.s8 %v1273
        %v1275 = vperm.slane %v1269, %v1274
        %v1277 = vunpack.c.l.s4 1934713408
        %v1278 = vunpack.c.0.s8 %v1277
        %v1279 = vperm.slane %v1271, %v1278
        %v1280 = vrot.slane %v1267, 4
        %v1281 = vsel %vm151, %v1280, %v1255
        %v1282 = vrot.slane %v1255, 4
        %v1283 = vsel %vm151, %v1267, %v1282
        %v1285 = vunpack.c.l.s4 1934713408
        %v1286 = vunpack.c.0.s8 %v1285
        %v1287 = vperm.slane %v1281, %v1286
        %v1289 = vunpack.c.l.s4 1934713408
        %v1290 = vunpack.c.0.s8 %v1289
        %v1291 = vperm.slane %v1283, %v1290
        %v1292 = vrot.slane %v1275, 4
        %v1293 = vsel %vm151, 0.0, %v1292
        %v1294 = vrot.slane %v1279, 4
        %v1295 = vsel %vm151, 0.0, %v1294
        %v1296 = vrot.slane %v1287, 4
        %v1297 = vsel %vm151, 0.0, %v1296
        %v1298 = vrot.slane %v1291, 4
        %v1299 = vsel %vm151, 0.0, %v1298
        %1301 = vrot.lane.b32.xlu0 %v1237, 16
        %v1302 = vpop.permute.xlu0 %1301
        %1305 = vrot.lane.b32.xlu0 %v1223, 32
        %v1306 = vpop.permute.xlu0 %1305
        %1309 = vrot.lane.b32.xlu0 %v1239, 48
        %v1310 = vpop.permute.xlu0 %1309
        %1313 = vrot.lane.b32.xlu0 %v1231, 64
        %v1314 = vpop.permute.xlu0 %1313
        %1317 = vrot.lane.b32.xlu0 %v1241, 80
        %v1318 = vpop.permute.xlu0 %1317
        %1321 = vrot.lane.b32.xlu0 %v1235, 96
        %v1322 = vpop.permute.xlu0 %1321
        %1325 = vrot.lane.b32.xlu0 %v1243, 112
        %v1326 = vpop.permute.xlu0 %1325
        %1329 = vrot.lane.b32.xlu0 %v1293, 16
        %v1330 = vpop.permute.xlu0 %1329
        %1333 = vrot.lane.b32.xlu0 %v1279, 32
        %v1334 = vpop.permute.xlu0 %1333
        %1337 = vrot.lane.b32.xlu0 %v1295, 48
        %v1338 = vpop.permute.xlu0 %1337
        %1341 = vrot.lane.b32.xlu0 %v1287, 64
        %v1342 = vpop.permute.xlu0 %1341
        %1345 = vrot.lane.b32.xlu0 %v1297, 80
        %v1346 = vpop.permute.xlu0 %1345
        %1349 = vrot.lane.b32.xlu0 %v1291, 96
        %v1350 = vpop.permute.xlu0 %1349
        %1353 = vrot.lane.b32.xlu0 %v1299, 112
        %v1354 = vpop.permute.xlu0 %1353
        %v1356 = vsel %vm319, %v1219, %v1302
        %v1357 = vsel %vm321, %v1356, %v1306
        %v1358 = vsel %vm323, %v1357, %v1310
        %v1359 = vsel %vm325, %v1358, %v1314
        %v1360 = vsel %vm327, %v1359, %v1318
        %v1361 = vsel %vm329, %v1360, %v1322
        %v1362 = vsel %vm331, %v1361, %v1326
        %v1363 = vsel %vm319, %v1275, %v1330
        %v1364 = vsel %vm321, %v1363, %v1334
        %v1365 = vsel %vm323, %v1364, %v1338
        %v1366 = vsel %vm325, %v1365, %v1342
        %v1367 = vsel %vm327, %v1366, %v1346
        %v1368 = vsel %vm329, %v1367, %v1350
        %v1369 = vsel %vm331, %v1368, %v1354
        %v1370 = vld [vmem:[%s141 + $0x2] sm:$0xff]
        %v1371 = vld [vmem:[%s141 + $0xa] sm:$0xff]
        %v1372 = vld [vmem:[%s141 + $0x1a] sm:$0xff]
        %v1373 = vld [vmem:[%s141 + $0x22] sm:$0xff]
        %v1374 = vld [vmem:[%s141 + $0x32] sm:$0xff]
        %v1375 = vld [vmem:[%s141 + $0x3a] sm:$0xff]
        %v1376 = vld [vmem:[%s141 + $0x4a] sm:$0xff]
        %v1377 = vld [vmem:[%s141 + $0x52] sm:$0xff]
        %v1378 = vrot.slane %v1374, 4
        %v1379 = vsel %vm151, %v1378, %v1370
        %v1380 = vrot.slane %v1370, 4
        %v1381 = vsel %vm151, %v1374, %v1380
        %v1383 = vunpack.c.l.s4 1983009808
        %v1384 = vunpack.c.0.s8 %v1383
        %v1385 = vperm.slane %v1379, %v1384
        %v1387 = vunpack.c.l.s4 1983009808
        %v1388 = vunpack.c.0.s8 %v1387
        %v1389 = vperm.slane %v1381, %v1388
        %v1390 = vrot.slane %v1376, 4
        %v1391 = vsel %vm151, %v1390, %v1372
        %v1392 = vrot.slane %v1372, 4
        %v1393 = vsel %vm151, %v1376, %v1392
        %v1395 = vunpack.c.l.s4 1983009808
        %v1396 = vunpack.c.0.s8 %v1395
        %v1397 = vperm.slane %v1391, %v1396
        %v1399 = vunpack.c.l.s4 1983009808
        %v1400 = vunpack.c.0.s8 %v1399
        %v1401 = vperm.slane %v1393, %v1400
        %v1402 = vrot.slane %v1397, 4
        %v1403 = vsel %vm151, %v1402, %v1385
        %v1404 = vrot.slane %v1385, 4
        %v1405 = vsel %vm151, %v1397, %v1404
        %v1407 = vunpack.c.l.s4 1934713408
        %v1408 = vunpack.c.0.s8 %v1407
        %v1409 = vperm.slane %v1403, %v1408
        %v1411 = vunpack.c.l.s4 1934713408
        %v1412 = vunpack.c.0.s8 %v1411
        %v1413 = vperm.slane %v1405, %v1412
        %v1414 = vrot.slane %v1401, 4
        %v1415 = vsel %vm151, %v1414, %v1389
        %v1416 = vrot.slane %v1389, 4
        %v1417 = vsel %vm151, %v1401, %v1416
        %v1419 = vunpack.c.l.s4 1934713408
        %v1420 = vunpack.c.0.s8 %v1419
        %v1421 = vperm.slane %v1415, %v1420
        %v1423 = vunpack.c.l.s4 1934713408
        %v1424 = vunpack.c.0.s8 %v1423
        %v1425 = vperm.slane %v1417, %v1424
        %v1426 = vrot.slane %v1409, 4
        %v1427 = vsel %vm151, 0.0, %v1426
        %v1428 = vrot.slane %v1413, 4
        %v1429 = vsel %vm151, 0.0, %v1428
        %v1430 = vrot.slane %v1421, 4
        %v1431 = vsel %vm151, 0.0, %v1430
        %v1432 = vrot.slane %v1425, 4
        %v1433 = vsel %vm151, 0.0, %v1432
        %v1434 = vrot.slane %v1375, 4
        %v1435 = vsel %vm151, %v1434, %v1371
        %v1436 = vrot.slane %v1371, 4
        %v1437 = vsel %vm151, %v1375, %v1436
        %v1439 = vunpack.c.l.s4 1983009808
        %v1440 = vunpack.c.0.s8 %v1439
        %v1441 = vperm.slane %v1435, %v1440
        %v1443 = vunpack.c.l.s4 1983009808
        %v1444 = vunpack.c.0.s8 %v1443
        %v1445 = vperm.slane %v1437, %v1444
        %v1446 = vrot.slane %v1377, 4
        %v1447 = vsel %vm151, %v1446, %v1373
        %v1448 = vrot.slane %v1373, 4
        %v1449 = vsel %vm151, %v1377, %v1448
        %v1451 = vunpack.c.l.s4 1983009808
        %v1452 = vunpack.c.0.s8 %v1451
        %v1453 = vperm.slane %v1447, %v1452
        %v1455 = vunpack.c.l.s4 1983009808
        %v1456 = vunpack.c.0.s8 %v1455
        %v1457 = vperm.slane %v1449, %v1456
        %v1458 = vrot.slane %v1453, 4
        %v1459 = vsel %vm151, %v1458, %v1441
        %v1460 = vrot.slane %v1441, 4
        %v1461 = vsel %vm151, %v1453, %v1460
        %v1463 = vunpack.c.l.s4 1934713408
        %v1464 = vunpack.c.0.s8 %v1463
        %v1465 = vperm.slane %v1459, %v1464
        %v1467 = vunpack.c.l.s4 1934713408
        %v1468 = vunpack.c.0.s8 %v1467
        %v1469 = vperm.slane %v1461, %v1468
        %v1470 = vrot.slane %v1457, 4
        %v1471 = vsel %vm151, %v1470, %v1445
        %v1472 = vrot.slane %v1445, 4
        %v1473 = vsel %vm151, %v1457, %v1472
        %v1475 = vunpack.c.l.s4 1934713408
        %v1476 = vunpack.c.0.s8 %v1475
        %v1477 = vperm.slane %v1471, %v1476
        %v1479 = vunpack.c.l.s4 1934713408
        %v1480 = vunpack.c.0.s8 %v1479
        %v1481 = vperm.slane %v1473, %v1480
        %v1482 = vrot.slane %v1465, 4
        %v1483 = vsel %vm151, 0.0, %v1482
        %v1484 = vrot.slane %v1469, 4
        %v1485 = vsel %vm151, 0.0, %v1484
        %v1486 = vrot.slane %v1477, 4
        %v1487 = vsel %vm151, 0.0, %v1486
        %v1488 = vrot.slane %v1481, 4
        %v1489 = vsel %vm151, 0.0, %v1488
        %1491 = vrot.lane.b32.xlu0 %v1427, 16
        %v1492 = vpop.permute.xlu0 %1491
        %1495 = vrot.lane.b32.xlu0 %v1413, 32
        %v1496 = vpop.permute.xlu0 %1495
        %1499 = vrot.lane.b32.xlu0 %v1429, 48
        %v1500 = vpop.permute.xlu0 %1499
        %1503 = vrot.lane.b32.xlu0 %v1421, 64
        %v1504 = vpop.permute.xlu0 %1503
        %1507 = vrot.lane.b32.xlu0 %v1431, 80
        %v1508 = vpop.permute.xlu0 %1507
        %1511 = vrot.lane.b32.xlu0 %v1425, 96
        %v1512 = vpop.permute.xlu0 %1511
        %1515 = vrot.lane.b32.xlu0 %v1433, 112
        %v1516 = vpop.permute.xlu0 %1515
        %1519 = vrot.lane.b32.xlu0 %v1483, 16
        %v1520 = vpop.permute.xlu0 %1519
        %1523 = vrot.lane.b32.xlu0 %v1469, 32
        %v1524 = vpop.permute.xlu0 %1523
        %1527 = vrot.lane.b32.xlu0 %v1485, 48
        %v1528 = vpop.permute.xlu0 %1527
        %1531 = vrot.lane.b32.xlu0 %v1477, 64
        %v1532 = vpop.permute.xlu0 %1531
        %1535 = vrot.lane.b32.xlu0 %v1487, 80
        %v1536 = vpop.permute.xlu0 %1535
        %1539 = vrot.lane.b32.xlu0 %v1481, 96
        %v1540 = vpop.permute.xlu0 %1539
        %1543 = vrot.lane.b32.xlu0 %v1489, 112
        %v1544 = vpop.permute.xlu0 %1543
        %v1546 = vsel %vm319, %v1409, %v1492
        %v1547 = vsel %vm321, %v1546, %v1496
        %v1548 = vsel %vm323, %v1547, %v1500
        %v1549 = vsel %vm325, %v1548, %v1504
        %v1550 = vsel %vm327, %v1549, %v1508
        %v1551 = vsel %vm329, %v1550, %v1512
        %v1552 = vsel %vm331, %v1551, %v1516
        %v1553 = vsel %vm319, %v1465, %v1520
        %v1554 = vsel %vm321, %v1553, %v1524
        %v1555 = vsel %vm323, %v1554, %v1528
        %v1556 = vsel %vm325, %v1555, %v1532
        %v1557 = vsel %vm327, %v1556, %v1536
        %v1558 = vsel %vm329, %v1557, %v1540
        %v1559 = vsel %vm331, %v1558, %v1544
        %1568 = vrot.lane.b32.xlu0 %v1370, 127
        %v1569 = vpop.permute.xlu0 %1568
        %1570 = vrot.lane.b32.xlu0 %v1371, 127
        %v1571 = vpop.permute.xlu0 %1570
        %1572 = vrot.lane.b32.xlu0 %v1372, 127
        %v1573 = vpop.permute.xlu0 %1572
        %1574 = vrot.lane.b32.xlu0 %v1373, 127
        %v1575 = vpop.permute.xlu0 %1574
        %1576 = vrot.lane.b32.xlu0 %v1374, 127
        %v1577 = vpop.permute.xlu0 %1576
        %1578 = vrot.lane.b32.xlu0 %v1375, 127
        %v1579 = vpop.permute.xlu0 %1578
        %1580 = vrot.lane.b32.xlu0 %v1376, 127
        %v1581 = vpop.permute.xlu0 %1580
        %1582 = vrot.lane.b32.xlu0 %v1377, 127
        %v1583 = vpop.permute.xlu0 %1582
        %v1592 = vrot.slane %v1577, 4
        %v1593 = vsel %vm151, %v1592, %v1569
        %v1594 = vrot.slane %v1569, 4
        %v1595 = vsel %vm151, %v1577, %v1594
        %v1597 = vunpack.c.l.s4 1983009808
        %v1598 = vunpack.c.0.s8 %v1597
        %v1599 = vperm.slane %v1593, %v1598
        %v1601 = vunpack.c.l.s4 1983009808
        %v1602 = vunpack.c.0.s8 %v1601
        %v1603 = vperm.slane %v1595, %v1602
        %v1604 = vrot.slane %v1581, 4
        %v1605 = vsel %vm151, %v1604, %v1573
        %v1606 = vrot.slane %v1573, 4
        %v1607 = vsel %vm151, %v1581, %v1606
        %v1609 = vunpack.c.l.s4 1983009808
        %v1610 = vunpack.c.0.s8 %v1609
        %v1611 = vperm.slane %v1605, %v1610
        %v1613 = vunpack.c.l.s4 1983009808
        %v1614 = vunpack.c.0.s8 %v1613
        %v1615 = vperm.slane %v1607, %v1614
        %v1616 = vrot.slane %v1611, 4
        %v1617 = vsel %vm151, %v1616, %v1599
        %v1618 = vrot.slane %v1599, 4
        %v1619 = vsel %vm151, %v1611, %v1618
        %v1621 = vunpack.c.l.s4 1934713408
        %v1622 = vunpack.c.0.s8 %v1621
        %v1623 = vperm.slane %v1617, %v1622
        %v1625 = vunpack.c.l.s4 1934713408
        %v1626 = vunpack.c.0.s8 %v1625
        %v1627 = vperm.slane %v1619, %v1626
        %v1628 = vrot.slane %v1615, 4
        %v1629 = vsel %vm151, %v1628, %v1603
        %v1630 = vrot.slane %v1603, 4
        %v1631 = vsel %vm151, %v1615, %v1630
        %v1633 = vunpack.c.l.s4 1934713408
        %v1634 = vunpack.c.0.s8 %v1633
        %v1635 = vperm.slane %v1629, %v1634
        %v1637 = vunpack.c.l.s4 1934713408
        %v1638 = vunpack.c.0.s8 %v1637
        %v1639 = vperm.slane %v1631, %v1638
        %v1640 = vrot.slane %v1623, 4
        %v1641 = vsel %vm151, 0.0, %v1640
        %v1642 = vrot.slane %v1627, 4
        %v1643 = vsel %vm151, 0.0, %v1642
        %v1644 = vrot.slane %v1635, 4
        %v1645 = vsel %vm151, 0.0, %v1644
        %v1646 = vrot.slane %v1639, 4
        %v1647 = vsel %vm151, 0.0, %v1646
        %v1648 = vrot.slane %v1579, 4
        %v1649 = vsel %vm151, %v1648, %v1571
        %v1650 = vrot.slane %v1571, 4
        %v1651 = vsel %vm151, %v1579, %v1650
        %v1653 = vunpack.c.l.s4 1983009808
        %v1654 = vunpack.c.0.s8 %v1653
        %v1655 = vperm.slane %v1649, %v1654
        %v1657 = vunpack.c.l.s4 1983009808
        %v1658 = vunpack.c.0.s8 %v1657
        %v1659 = vperm.slane %v1651, %v1658
        %v1660 = vrot.slane %v1583, 4
        %v1661 = vsel %vm151, %v1660, %v1575
        %v1662 = vrot.slane %v1575, 4
        %v1663 = vsel %vm151, %v1583, %v1662
        %v1665 = vunpack.c.l.s4 1983009808
        %v1666 = vunpack.c.0.s8 %v1665
        %v1667 = vperm.slane %v1661, %v1666
        %v1669 = vunpack.c.l.s4 1983009808
        %v1670 = vunpack.c.0.s8 %v1669
        %v1671 = vperm.slane %v1663, %v1670
        %v1672 = vrot.slane %v1667, 4
        %v1673 = vsel %vm151, %v1672, %v1655
        %v1674 = vrot.slane %v1655, 4
        %v1675 = vsel %vm151, %v1667, %v1674
        %v1677 = vunpack.c.l.s4 1934713408
        %v1678 = vunpack.c.0.s8 %v1677
        %v1679 = vperm.slane %v1673, %v1678
        %v1681 = vunpack.c.l.s4 1934713408
        %v1682 = vunpack.c.0.s8 %v1681
        %v1683 = vperm.slane %v1675, %v1682
        %v1684 = vrot.slane %v1671, 4
        %v1685 = vsel %vm151, %v1684, %v1659
        %v1686 = vrot.slane %v1659, 4
        %v1687 = vsel %vm151, %v1671, %v1686
        %v1689 = vunpack.c.l.s4 1934713408
        %v1690 = vunpack.c.0.s8 %v1689
        %v1691 = vperm.slane %v1685, %v1690
        %v1693 = vunpack.c.l.s4 1934713408
        %v1694 = vunpack.c.0.s8 %v1693
        %v1695 = vperm.slane %v1687, %v1694
        %v1696 = vrot.slane %v1679, 4
        %v1697 = vsel %vm151, 0.0, %v1696
        %v1698 = vrot.slane %v1683, 4
        %v1699 = vsel %vm151, 0.0, %v1698
        %v1700 = vrot.slane %v1691, 4
        %v1701 = vsel %vm151, 0.0, %v1700
        %v1702 = vrot.slane %v1695, 4
        %v1703 = vsel %vm151, 0.0, %v1702
        %1705 = vrot.lane.b32.xlu0 %v1641, 16
        %v1706 = vpop.permute.xlu0 %1705
        %1709 = vrot.lane.b32.xlu0 %v1627, 32
        %v1710 = vpop.permute.xlu0 %1709
        %1713 = vrot.lane.b32.xlu0 %v1643, 48
        %v1714 = vpop.permute.xlu0 %1713
        %1717 = vrot.lane.b32.xlu0 %v1635, 64
        %v1718 = vpop.permute.xlu0 %1717
        %1721 = vrot.lane.b32.xlu0 %v1645, 80
        %v1722 = vpop.permute.xlu0 %1721
        %1725 = vrot.lane.b32.xlu0 %v1639, 96
        %v1726 = vpop.permute.xlu0 %1725
        %1729 = vrot.lane.b32.xlu0 %v1647, 112
        %v1730 = vpop.permute.xlu0 %1729
        %1733 = vrot.lane.b32.xlu0 %v1697, 16
        %v1734 = vpop.permute.xlu0 %1733
        %1737 = vrot.lane.b32.xlu0 %v1683, 32
        %v1738 = vpop.permute.xlu0 %1737
        %1741 = vrot.lane.b32.xlu0 %v1699, 48
        %v1742 = vpop.permute.xlu0 %1741
        %1745 = vrot.lane.b32.xlu0 %v1691, 64
        %v1746 = vpop.permute.xlu0 %1745
        %1749 = vrot.lane.b32.xlu0 %v1701, 80
        %v1750 = vpop.permute.xlu0 %1749
        %1753 = vrot.lane.b32.xlu0 %v1695, 96
        %v1754 = vpop.permute.xlu0 %1753
        %1757 = vrot.lane.b32.xlu0 %v1703, 112
        %v1758 = vpop.permute.xlu0 %1757
        %v1760 = vsel %vm319, %v1623, %v1706
        %v1761 = vsel %vm321, %v1760, %v1710
        %v1762 = vsel %vm323, %v1761, %v1714
        %v1763 = vsel %vm325, %v1762, %v1718
        %v1764 = vsel %vm327, %v1763, %v1722
        %v1765 = vsel %vm329, %v1764, %v1726
        %v1766 = vsel %vm331, %v1765, %v1730
        %v1767 = vsel %vm319, %v1679, %v1734
        %v1768 = vsel %vm321, %v1767, %v1738
        %v1769 = vsel %vm323, %v1768, %v1742
        %v1770 = vsel %vm325, %v1769, %v1746
        %v1771 = vsel %vm327, %v1770, %v1750
        %v1772 = vsel %vm329, %v1771, %v1754
        %v1773 = vsel %vm331, %v1772, %v1758
        %1774 = vrot.lane.b32.xlu0 %v1370, 126
        %v1775 = vpop.permute.xlu0 %1774
        %1776 = vrot.lane.b32.xlu0 %v1371, 126
        %v1777 = vpop.permute.xlu0 %1776
        %1778 = vrot.lane.b32.xlu0 %v1372, 126
        %v1779 = vpop.permute.xlu0 %1778
        %1780 = vrot.lane.b32.xlu0 %v1373, 126
        %v1781 = vpop.permute.xlu0 %1780
        %1782 = vrot.lane.b32.xlu0 %v1374, 126
        %v1783 = vpop.permute.xlu0 %1782
        %1784 = vrot.lane.b32.xlu0 %v1375, 126
        %v1785 = vpop.permute.xlu0 %1784
        %1786 = vrot.lane.b32.xlu0 %v1376, 126
        %v1787 = vpop.permute.xlu0 %1786
        %1788 = vrot.lane.b32.xlu0 %v1377, 126
        %v1789 = vpop.permute.xlu0 %1788
        %v1798 = vrot.slane %v1783, 4
        %v1799 = vsel %vm151, %v1798, %v1775
        %v1800 = vrot.slane %v1775, 4
        %v1801 = vsel %vm151, %v1783, %v1800
        %v1803 = vunpack.c.l.s4 1983009808
        %v1804 = vunpack.c.0.s8 %v1803
        %v1805 = vperm.slane %v1799, %v1804
        %v1807 = vunpack.c.l.s4 1983009808
        %v1808 = vunpack.c.0.s8 %v1807
        %v1809 = vperm.slane %v1801, %v1808
        %v1810 = vrot.slane %v1787, 4
        %v1811 = vsel %vm151, %v1810, %v1779
        %v1812 = vrot.slane %v1779, 4
        %v1813 = vsel %vm151, %v1787, %v1812
        %v1815 = vunpack.c.l.s4 1983009808
        %v1816 = vunpack.c.0.s8 %v1815
        %v1817 = vperm.slane %v1811, %v1816
        %v1819 = vunpack.c.l.s4 1983009808
        %v1820 = vunpack.c.0.s8 %v1819
        %v1821 = vperm.slane %v1813, %v1820
        %v1822 = vrot.slane %v1817, 4
        %v1823 = vsel %vm151, %v1822, %v1805
        %v1824 = vrot.slane %v1805, 4
        %v1825 = vsel %vm151, %v1817, %v1824
        %v1827 = vunpack.c.l.s4 1934713408
        %v1828 = vunpack.c.0.s8 %v1827
        %v1829 = vperm.slane %v1823, %v1828
        %v1831 = vunpack.c.l.s4 1934713408
        %v1832 = vunpack.c.0.s8 %v1831
        %v1833 = vperm.slane %v1825, %v1832
        %v1834 = vrot.slane %v1821, 4
        %v1835 = vsel %vm151, %v1834, %v1809
        %v1836 = vrot.slane %v1809, 4
        %v1837 = vsel %vm151, %v1821, %v1836
        %v1839 = vunpack.c.l.s4 1934713408
        %v1840 = vunpack.c.0.s8 %v1839
        %v1841 = vperm.slane %v1835, %v1840
        %v1843 = vunpack.c.l.s4 1934713408
        %v1844 = vunpack.c.0.s8 %v1843
        %v1845 = vperm.slane %v1837, %v1844
        %v1846 = vrot.slane %v1829, 4
        %v1847 = vsel %vm151, 0.0, %v1846
        %v1848 = vrot.slane %v1833, 4
        %v1849 = vsel %vm151, 0.0, %v1848
        %v1850 = vrot.slane %v1841, 4
        %v1851 = vsel %vm151, 0.0, %v1850
        %v1852 = vrot.slane %v1845, 4
        %v1853 = vsel %vm151, 0.0, %v1852
        %v1854 = vrot.slane %v1785, 4
        %v1855 = vsel %vm151, %v1854, %v1777
        %v1856 = vrot.slane %v1777, 4
        %v1857 = vsel %vm151, %v1785, %v1856
        %v1859 = vunpack.c.l.s4 1983009808
        %v1860 = vunpack.c.0.s8 %v1859
        %v1861 = vperm.slane %v1855, %v1860
        %v1863 = vunpack.c.l.s4 1983009808
        %v1864 = vunpack.c.0.s8 %v1863
        %v1865 = vperm.slane %v1857, %v1864
        %v1866 = vrot.slane %v1789, 4
        %v1867 = vsel %vm151, %v1866, %v1781
        %v1868 = vrot.slane %v1781, 4
        %v1869 = vsel %vm151, %v1789, %v1868
        %v1871 = vunpack.c.l.s4 1983009808
        %v1872 = vunpack.c.0.s8 %v1871
        %v1873 = vperm.slane %v1867, %v1872
        %v1875 = vunpack.c.l.s4 1983009808
        %v1876 = vunpack.c.0.s8 %v1875
        %v1877 = vperm.slane %v1869, %v1876
        %v1878 = vrot.slane %v1873, 4
        %v1879 = vsel %vm151, %v1878, %v1861
        %v1880 = vrot.slane %v1861, 4
        %v1881 = vsel %vm151, %v1873, %v1880
        %v1883 = vunpack.c.l.s4 1934713408
        %v1884 = vunpack.c.0.s8 %v1883
        %v1885 = vperm.slane %v1879, %v1884
        %v1887 = vunpack.c.l.s4 1934713408
        %v1888 = vunpack.c.0.s8 %v1887
        %v1889 = vperm.slane %v1881, %v1888
        %v1890 = vrot.slane %v1877, 4
        %v1891 = vsel %vm151, %v1890, %v1865
        %v1892 = vrot.slane %v1865, 4
        %v1893 = vsel %vm151, %v1877, %v1892
        %v1895 = vunpack.c.l.s4 1934713408
        %v1896 = vunpack.c.0.s8 %v1895
        %v1897 = vperm.slane %v1891, %v1896
        %v1899 = vunpack.c.l.s4 1934713408
        %v1900 = vunpack.c.0.s8 %v1899
        %v1901 = vperm.slane %v1893, %v1900
        %v1902 = vrot.slane %v1885, 4
        %v1903 = vsel %vm151, 0.0, %v1902
        %v1904 = vrot.slane %v1889, 4
        %v1905 = vsel %vm151, 0.0, %v1904
        %v1906 = vrot.slane %v1897, 4
        %v1907 = vsel %vm151, 0.0, %v1906
        %v1908 = vrot.slane %v1901, 4
        %v1909 = vsel %vm151, 0.0, %v1908
        %1911 = vrot.lane.b32.xlu0 %v1847, 16
        %v1912 = vpop.permute.xlu0 %1911
        %1915 = vrot.lane.b32.xlu0 %v1833, 32
        %v1916 = vpop.permute.xlu0 %1915
        %1919 = vrot.lane.b32.xlu0 %v1849, 48
        %v1920 = vpop.permute.xlu0 %1919
        %1923 = vrot.lane.b32.xlu0 %v1841, 64
        %v1924 = vpop.permute.xlu0 %1923
        %1927 = vrot.lane.b32.xlu0 %v1851, 80
        %v1928 = vpop.permute.xlu0 %1927
        %1931 = vrot.lane.b32.xlu0 %v1845, 96
        %v1932 = vpop.permute.xlu0 %1931
        %1935 = vrot.lane.b32.xlu0 %v1853, 112
        %v1936 = vpop.permute.xlu0 %1935
        %1939 = vrot.lane.b32.xlu0 %v1903, 16
        %v1940 = vpop.permute.xlu0 %1939
        %1943 = vrot.lane.b32.xlu0 %v1889, 32
        %v1944 = vpop.permute.xlu0 %1943
        %1947 = vrot.lane.b32.xlu0 %v1905, 48
        %v1948 = vpop.permute.xlu0 %1947
        %1951 = vrot.lane.b32.xlu0 %v1897, 64
        %v1952 = vpop.permute.xlu0 %1951
        %1955 = vrot.lane.b32.xlu0 %v1907, 80
        %v1956 = vpop.permute.xlu0 %1955
        %1959 = vrot.lane.b32.xlu0 %v1901, 96
        %v1960 = vpop.permute.xlu0 %1959
        %1963 = vrot.lane.b32.xlu0 %v1909, 112
        %v1964 = vpop.permute.xlu0 %1963
        %v1966 = vsel %vm319, %v1829, %v1912
        %v1967 = vsel %vm321, %v1966, %v1916
        %v1968 = vsel %vm323, %v1967, %v1920
        %v1969 = vsel %vm325, %v1968, %v1924
        %v1970 = vsel %vm327, %v1969, %v1928
        %v1971 = vsel %vm329, %v1970, %v1932
        %v1972 = vsel %vm331, %v1971, %v1936
        %v1973 = vsel %vm319, %v1885, %v1940
        %v1974 = vsel %vm321, %v1973, %v1944
        %v1975 = vsel %vm323, %v1974, %v1948
        %v1976 = vsel %vm325, %v1975, %v1952
        %v1977 = vsel %vm327, %v1976, %v1956
        %v1978 = vsel %vm329, %v1977, %v1960
        %v1979 = vsel %vm331, %v1978, %v1964
        %v1982 = vrot.slane %v546, 4
        %v1983 = vrot.slane %v553, 4
        %v1988 = vrot.slane %v942, 4
        %v1989 = vrot.slane %v949, 4
        %v1994 = vrot.slane %v1362, 4
        %v1995 = vrot.slane %v1369, 4
        %v2000 = vrot.slane %v1766, 4
        %v2001 = vrot.slane %v1773, 4
        %vm2004 = vcmask 1043456
        %v2005 = vsel %vm2004, %v332, %v1982
        %v2006 = vsel %vm2004, %v339, %v1983
        %v2007 = vsel %vm2004, %v752, %v1988
        %v2008 = vsel %vm2004, %v759, %v1989
        %v2009 = vsel %vm2004, %v1156, %v1994
        %v2010 = vsel %vm2004, %v1163, %v1995
        %v2011 = vsel %vm2004, %v1552, %v2000
        %v2012 = vsel %vm2004, %v1559, %v2001
        %v2013 = vld [vmem:[%s1] sm:$0xff]
        %vm2014 = vcmask 293888
        %v2016 = vsel %vm2014, %v2013, 0
        %v2019 = vsel %vm2004, %v1972, 0
        %v2022 = vsel %vm2004, %v1979, 0
        %2024 = vmatpush.msra.mxu0 0.0
        %2025 = vmatpush.msra.mxu0 0.0
        %2026 = vmatpush.msra.mxu0 0.0
        %2027 = vmatpush.msra.mxu0 0.0
        %2028 = vmatpush.msra.mxu0 0.0
        %2029 = vmatpush.msra.mxu0 0.0
        %2030 = vmatpush.msra.mxu0 0.0
        %2031 = vmatpush.msra.mxu0 0.0
        %2032 = vmatpush.msra.mxu0 0.0
        %2033 = vmatpush.msra.mxu0 0.0
        %2034 = vmatpush.msra.mxu0 0.0
        %2035 = vmatpush.msra.mxu0 %v2019
        %2036 = vmatpush.msra.mxu0 %v2011
        %2037 = vmatpush.msra.mxu0 %v2009
        %2038 = vmatpush.msra.mxu0 %v2007
        %2039 = vmatpush.msra.mxu0 %v2005
        %2040 = vmatmul.f32.gmra.mxu0 %v2016
        %v2041 = vpop.f32.mrf.mxu0
        %v2042 = vadd.f32 0.0, %v2041
        %2043 = vdwg.mxu0
        %2044 = vmatpush.msra.mxu0 0.0
        %2045 = vmatpush.msra.mxu0 0.0
        %2046 = vmatpush.msra.mxu0 0.0
        %2047 = vmatpush.msra.mxu0 0.0
        %2048 = vmatpush.msra.mxu0 0.0
        %2049 = vmatpush.msra.mxu0 0.0
        %2050 = vmatpush.msra.mxu0 0.0
        %2051 = vmatpush.msra.mxu0 0.0
        %2052 = vmatpush.msra.mxu0 0.0
        %2053 = vmatpush.msra.mxu0 0.0
        %2054 = vmatpush.msra.mxu0 0.0
        %2055 = vmatpush.msra.mxu0 %v2022
        %2056 = vmatpush.msra.mxu0 %v2012
        %2057 = vmatpush.msra.mxu0 %v2010
        %2058 = vmatpush.msra.mxu0 %v2008
        %2059 = vmatpush.msra.mxu0 %v2006
        %2060 = vmatmul.f32.gmra.mxu0 %v2016
        %v2061 = vpop.f32.mrf.mxu0
        %v2062 = vadd.f32 0.0, %v2061
        %2063 = vdwg.mxu0
        %v2064 = vxor.u32 %v2042, 2147483648
        %v2065 = vxor.u32 %v2062, 2147483648
        %v2066 = vmul.f32 %v2064, 1.442695
        %v2067 = vpow.pop %v2066
        %v2068 = vmul.f32 %v2065, 1.442695
        %v2069 = vpow.pop %v2068
        %v2070 = vadd.f32 %v2067, 1.0
        %v2071 = vadd.f32 %v2069, 1.0
        %v2072 = vrcp.pop %v2070
        %v2073 = vmul.f32 %v2070, %v2072
        %v2074 = vsub.f32 1.0, %v2073
        %v2075 = vmul.f32 %v2072, %v2074
        %v2076 = vadd.f32 %v2072, %v2075
        %vm2077 = vweird.f32 %v2070
        %vm2078 = vweird.f32 %v2072
        %vm2079 = vmor %vm2077, %vm2078
        %v2080 = vsel %vm2079, %v2072, %v2076
        %v2081 = vand.u32 2147483647, %v2070
        %vm2082 = vcmp.eq.f32.partialorder %v2081, 8.507059e+37
        %v2083 = vand.u32 %v2070, 2147483648
        %v2084 = vor.u32 1.1754944e-38, %v2083
        %v2085 = vsel %vm2082, %v2084, %v2080
        %v2086 = vmul.f32 1.0, %v2085
        %v2087 = vrcp.pop %v2071
        %v2088 = vmul.f32 %v2071, %v2087
        %v2089 = vsub.f32 1.0, %v2088
        %v2090 = vmul.f32 %v2087, %v2089
        %v2091 = vadd.f32 %v2087, %v2090
        %vm2092 = vweird.f32 %v2071
        %vm2093 = vweird.f32 %v2087
        %vm2094 = vmor %vm2092, %vm2093
        %v2095 = vsel %vm2094, %v2087, %v2091
        %v2096 = vand.u32 2147483647, %v2071
        %vm2097 = vcmp.eq.f32.partialorder %v2096, 8.507059e+37
        %v2098 = vand.u32 %v2071, 2147483648
        %v2099 = vor.u32 1.1754944e-38, %v2098
        %v2100 = vsel %vm2097, %v2099, %v2095
        %v2101 = vmul.f32 1.0, %v2100
        %v2104 = vrot.slane %v2086, 4
        %v2105 = vrot.slane %v2101, 4
        %v2108 = vmul.f32 %v2042, %v2104
        %v2109 = vmul.f32 %v2062, %v2105
        %v2112 = vrot.slane %v2109, 4
        %v2113 = vsel %vm2004, %v2108, %v2112
        %2115 = vst [vmem:[%s136] sm:$0xff] %v2113
        %s2116 = sand.u32 %s71, 1
        %s2117 = scalar_lea.sflag [#allocation3], %s2116
        %s2118 = sand.u32 %s71, 1
        %s2119 = smul.addr %s2118, 8
        %s2120 = scalar_lea.vmem [#allocation2], %s2119
        // Predicated region
        $region29: #{tpu_custom_call.1} parent=27 // pred_check
          %p2121 = pneg %p81
        $region30: #{tpu_custom_call.1} parent=27 // pred_check_branch
          %2123 = sbr.rel (%p2121) target = $region32
        $region31: #{tpu_custom_call.1} parent=27 // pred_region
          %2125 = vsyncadd %s2117, 0
          %s2126 = smul.addr %s16, 2
          %s2127 = smul.addr %s2126, 4
          %s2128 = scalar_lea.hbm %s2, %s2127
          %s2130 = sshll.u32 %s2120, 4
          %s2131 = int_to_ptr.vmem [resolvable:$true] %s2130
          %s2132 = sshll.u32 %s2128, 4
          %s2133 = int_to_ptr.hbm [resolvable:$true] %s2132
          %2135 = dma.vmem_to_hbm [thread:$0]  %s2131, 128, %s2133, %s2117
        $region32: #{tpu_custom_call.1} parent=27 // pred_fallthru
          _
      $region28: #{tpu_custom_call.1} parent=5 // pred_fallthru
        _
      %p2136 = scmp.le.s32.totalorder 2, %s11
      // Predicated region
      $region33: #{tpu_custom_call.1} parent=5 // pred_check
        %p2137 = pneg %p2136
      $region34: #{tpu_custom_call.1} parent=5 // pred_check_branch
        %2139 = sbr.rel (%p2137) target = $region36
      $region35: #{tpu_custom_call.1} parent=5 // pred_region
        %s2140 = ssub.s32 %s11, 2
        // Predicated region
        $region37: #{tpu_custom_call.1} parent=35 // pred_check
          %p2141 = pneg %p87
        $region38: #{tpu_custom_call.1} parent=35 // pred_check_branch
          %2143 = sbr.rel (%p2141) target = $region40
        $region39: #{tpu_custom_call.1} parent=35 // pred_region
          %s2144 = sand.u32 %s72, 1
          %s2145 = scalar_lea.sflag [#allocation3], %s2144
          %s2146 = sand.u32 %s72, 1
          %s2147 = smul.addr %s2146, 8
          %s2148 = scalar_lea.vmem [#allocation2], %s2147
          %2150 = dma.done %s2145, 128
        $region40: #{tpu_custom_call.1} parent=35 // pred_fallthru
          _
      $region36: #{tpu_custom_call.1} parent=5 // pred_fallthru
        _
    $region6: #{tpu_custom_call.1} parent=1 // loop_footer
      %s15 = sadd.s32 1, %s11
    $region7: #{tpu_custom_call.1} parent=1 // loop_footer_branch
      %10 = sbr.rel target = $region3
    $region8: #{tpu_custom_call.1} parent=1 // loop_exit
      _
    %2151 = vsyncpa [#allocation3], 1
    %s2152 = scalar_lea.sflag [#allocation3], 1
    %2153 = vsyncpa %s2152, 1

</llo_original>
